<compile_context>
chip_gen: v6e
topology: v6e:2x2x1
jax: 0.10.0
libtpu: 0.0.40
codegen_flags: <defaults>
</compile_context>

<pallas_src>
import jax
import jax.numpy as jnp
from jax import lax
from jax.experimental import pallas as pl
from jax.experimental.pallas import tpu as pltpu
import numpy as np

_EPS = 1e-5


# ---------------------------------------------------------------------------
# Wrapper-side constant construction (tiny, one-time XLA ops).
# ---------------------------------------------------------------------------
def _banded_conv_weights(w_hwio, W):
    """Fold the 3 kw taps and the Ci contraction of a 3x3 'same' conv into 3 lane-dense band
    matrices band[kh] of shape (W*Ci, W*Co) so that, in the (row, W*C) layout,
        out[t, :] = sum_kh a_rowpadded[t + kh, :] @ band[kh].
    Left/right zero padding is encoded by the band matrix (out-of-range kw taps dropped), so no
    column-padded activation copies exist anywhere."""
    KH, KW, Ci, Co = w_hwio.shape
    bands = []
    for kh in range(KH):
        m = jnp.zeros((W * Ci, W * Co), jnp.float32)
        for kw in range(KW):
            sel = jnp.eye(W, W, k=1 - kw, dtype=jnp.float32)      # sel[w+kw-1, w] = 1
            m = m + jnp.kron(sel, w_hwio[kh, kw].astype(jnp.float32))
        bands.append(m)
    return jnp.stack(bands, axis=0)                               # (3, W*Ci, W*Co)


def _fold_bcast(W, C):
    """(W*C, W*C) matrix: sum a (1, W*C) lane row over its W channel-groups and broadcast the
    per-channel total back to every group -- turns the BN channel reduction into one matmul."""
    return jnp.kron(jnp.ones((W, W), jnp.float32), jnp.eye(C, dtype=jnp.float32))


# ---------------------------------------------------------------------------
# Fused kernel: BN1+ReLU+conv1 -> BN2(stats in-kernel)+ReLU+conv2 + identity.
# ---------------------------------------------------------------------------
def _make_fused_kernel(N, H, W, Cin, Cout):
    Hp = H + 2                      # per-image row block incl. top/bottom conv padding rows
    M = N * Hp - 2                  # rows produced per band matmul (incl. N-1 discarded rows)
    WCi, WCo = W * Cin, W * Cout
    inv_cnt = 1.0 / float(N * H * W)

    def kernel(x_ref, idn_ref, b1_ref, b2_ref, g1_ref, bt1_ref, g2_ref, bt2_ref,
               G1_ref, G2_ref, o_ref, a1_scr, a2_scr):
        # ---- BN1: global training-mode batch stats, computed in-kernel ----
        x = x_ref[...]                                               # (N*H, W*Cin)
        xg = jnp.dot(x, G1_ref[...], preferred_element_type=jnp.float32)
        mean1 = jnp.sum(xg, axis=0, keepdims=True) * inv_cnt         # per-channel, lane-broadcast
        d1 = x - mean1
        vg = jnp.dot(d1 * d1, G1_ref[...], preferred_element_type=jnp.float32)
        var1 = jnp.sum(vg, axis=0, keepdims=True) * inv_cnt          # biased (torch BN forward)
        scale1 = g1_ref[...] * lax.rsqrt(var1 + _EPS)
        shift1 = bt1_ref[...] - mean1 * scale1
        a1 = jnp.maximum(x * scale1 + shift1, 0.0)                   # BN1 + ReLU

        # Row-padded copy of a1: the zero-initialized rows 0 and H+1 of each image block ARE the
        # conv 'same' row padding (column padding is inside the band weights).
        a1_scr[...] = jnp.zeros_like(a1_scr)
        for n in range(N):                                           # static unroll (small N)
            a1_scr[n * Hp + 1:n * Hp + 1 + H, :] = a1[n * H:(n + 1) * H, :]

        # ---- conv1: 3 band matmuls, batch+rows folded into the matmul M dimension ----
        z1 = jnp.zeros((M, WCo), jnp.float32)
        for kh in range(3):
            z1 = z1 + jnp.dot(a1_scr[kh:kh + M, :], b1_ref[kh],
                              preferred_element_type=jnp.float32)

        # ---- BN2 stats over z1 (z1 never round-trips HBM) ----
        zs = jnp.zeros((1, WCo), jnp.float32)
        for n in range(N):                                           # valid rows only
            zg = jnp.dot(z1[n * Hp:n * Hp + H, :], G2_ref[...],
                         preferred_element_type=jnp.float32)
            zs = zs + jnp.sum(zg, axis=0, keepdims=True)
        mean2 = zs * inv_cnt
        vs = jnp.zeros((1, WCo), jnp.float32)
        for n in range(N):
            dz = z1[n * Hp:n * Hp + H, :] - mean2
            dzg = jnp.dot(dz * dz, G2_ref[...], preferred_element_type=jnp.float32)
            vs = vs + jnp.sum(dzg, axis=0, keepdims=True)
        var2 = vs * inv_cnt
        scale2 = g2_ref[...] * lax.rsqrt(var2 + _EPS)
        shift2 = bt2_ref[...] - mean2 * scale2
        a2 = jnp.maximum(z1 * scale2 + shift2, 0.0)                  # BN2 + ReLU

        a2_scr[...] = jnp.zeros_like(a2_scr)
        for n in range(N):
            a2_scr[n * Hp + 1:n * Hp + 1 + H, :] = a2[n * Hp:n * Hp + H, :]

        # ---- conv2 + channel-zero-padded identity (plain VPU add, no spread matmul) ----
        acc = jnp.zeros((M, WCo), jnp.float32)
        for kh in range(3):
            acc = acc + jnp.dot(a2_scr[kh:kh + M, :], b2_ref[kh],
                                preferred_element_type=jnp.float32)
        for n in range(N):                                           # lane-dense (., 128) stores
            o_ref[n * H:(n + 1) * H, :] = (
                acc[n * Hp:n * Hp + H, :] + idn_ref[n * H:(n + 1) * H, :]
            ).astype(o_ref.dtype)

    return kernel


# ---------------------------------------------------------------------------
# Full residual-block forward (NCHW in / NCHW out, PyTorch-style params).
# ---------------------------------------------------------------------------
def residual_block_forward(x_nchw, params, stride=1):
    """params = (gamma1(Cin,), beta1(Cin,), w1 OIHW, gamma2(Cout,), beta2(Cout,), w2 OIHW)."""
    # TODO(synk): stride != 1 path (nearest downsample + strided conv) not implemented;
    # this configuration uses stride=1.
    assert stride == 1
    g1, b1, w1_oihw, g2, b2, w2_oihw = params
    N, Cin, H, W = x_nchw.shape
    Cout = w1_oihw.shape[0]
    assert Cout >= Cin
    Hp = H + 2
    M = N * Hp - 2
    WCi, WCo = W * Cin, W * Cout
    # TODO(synk): whole-activation-in-VMEM fusion assumes small N*H*W*C; large shapes would need
    # a batch-split grid with partial-BN-stat outputs instead.

    # Lane-dense row layouts (no padding / halo materialized in HBM).
    x_nhwc = jnp.transpose(x_nchw, (0, 2, 3, 1)).astype(jnp.float32)
    x_rows = x_nhwc.reshape(N * H, WCi)
    idn_rows = jnp.pad(x_nhwc, ((0, 0), (0, 0), (0, 0), (0, Cout - Cin))).reshape(N * H, WCo)

    band1 = _banded_conv_weights(jnp.transpose(w1_oihw, (2, 3, 1, 0)).astype(jnp.float32), W)
    band2 = _banded_conv_weights(jnp.transpose(w2_oihw, (2, 3, 1, 0)).astype(jnp.float32), W)
    g1_row = jnp.tile(g1.astype(jnp.float32), W)[None, :]
    bt1_row = jnp.tile(b1.astype(jnp.float32), W)[None, :]
    g2_row = jnp.tile(g2.astype(jnp.float32), W)[None, :]
    bt2_row = jnp.tile(b2.astype(jnp.float32), W)[None, :]
    G1 = _fold_bcast(W, Cin)
    G2 = _fold_bcast(W, Cout)

    def full_spec(shape):
        nd = len(shape)
        return pl.BlockSpec(shape, lambda i, _nd=nd: (0,) * _nd)

    flops = (2 * M * WCi * WCo * 3 + 2 * M * WCo * WCo * 3                 # conv band matmuls
             + 2 * 2 * N * H * WCi * WCi + 2 * 2 * N * H * WCo * WCo)      # BN fold matmuls
    cost = pl.CostEstimate(
        flops=flops, transcendentals=WCi + WCo,
        bytes_accessed=4 * (x_rows.size + idn_rows.size + band1.size + band2.size
                            + G1.size + G2.size + 2 * (WCi + WCo) + N * H * WCo))

    kernel = _make_fused_kernel(N, H, W, Cin, Cout)
    out2d = pl.pallas_call(
        kernel,
        out_shape=jax.ShapeDtypeStruct((N * H, WCo), x_nchw.dtype),
        grid_spec=pltpu.PrefetchScalarGridSpec(
            num_scalar_prefetch=0,
            grid=(1,),                 # single fused step: z1 + BN2 stats stay on-chip
            in_specs=[full_spec((N * H, WCi)), full_spec((N * H, WCo)),
                      full_spec((3, WCi, WCo)), full_spec((3, WCo, WCo)),
                      full_spec((1, WCi)), full_spec((1, WCi)),
                      full_spec((1, WCo)), full_spec((1, WCo)),
                      full_spec((WCi, WCi)), full_spec((WCo, WCo))],
            out_specs=full_spec((N * H, WCo)),
            scratch_shapes=[pltpu.VMEM((N * Hp, WCi), jnp.float32),
                            pltpu.VMEM((N * Hp, WCo), jnp.float32)]),
        compiler_params=pltpu.CompilerParams(dimension_semantics=("arbitrary",)),
        cost_estimate=cost,
    )(x_rows, idn_rows, band1, band2, g1_row, bt1_row, g2_row, bt2_row, G1, G2)

    return jnp.transpose(out2d.reshape(N, H, W, Cout), (0, 3, 1, 2))       # back to NCHW


# ---------------------------------------------------------------------------
# Pure-JAX reference (mirrors the PyTorch module, stride=1) for verification.
# ---------------------------------------------------------------------------
def reference_forward(x, params):
    g1, b1, w1, g2, b2, w2 = params

    def bn(v, g, b):
        mean = jnp.mean(v, axis=(0, 2, 3), keepdims=True)
        var = jnp.mean(jnp.square(v - mean), axis=(0, 2, 3), keepdims=True)
        return (v - mean) / jnp.sqrt(var + _EPS) * g.reshape(1, -1, 1, 1) + b.reshape(1, -1, 1, 1)

    def conv(v, w):
        return lax.conv_general_dilated(v, w, (1, 1), [(1, 1), (1, 1)],
                                        dimension_numbers=('NCHW', 'OIHW', 'NCHW'))

    z = jax.nn.relu(bn(x, g1, b1))
    z = conv(z, w1)
    z = jax.nn.relu(bn(z, g2, b2))
    z = conv(z, w2)
    N, Cin, H, W = x.shape
    Cout = w1.shape[0]
    ident = jnp.concatenate([x, jnp.zeros((N, Cout - Cin, H, W), x.dtype)], axis=1) \
        if Cout != Cin else x
    return ident + z


if __name__ == "__main__":
    N, Cin, H, W = 2, 4, 16, 16
    Cout = 8  # channels != in_channels exercises the zero-pad identity branch

    key = jax.random.PRNGKey(0)
    k1, k2, kx = jax.random.split(key, 3)

    g1 = jnp.ones((Cin,), jnp.float32)
    b1 = jnp.zeros((Cin,), jnp.float32)
    g2 = jnp.ones((Cout,), jnp.float32)
    b2 = jnp.zeros((Cout,), jnp.float32)
    w1 = 0.1 * jax.random.normal(k1, (Cout, Cin, 3, 3), jnp.float32)   # OIHW
    w2 = 0.1 * jax.random.normal(k2, (Cout, Cout, 3, 3), jnp.float32)  # OIHW
    x = jax.random.normal(kx, (N, Cin, H, W), jnp.float32)             # NCHW

    params = (g1, b1, w1, g2, b2, w2)
    fwd = jax.jit(lambda xx, pp: residual_block_forward(xx, pp, stride=1))
    out = jax.block_until_ready(fwd(x, params))

    ref = reference_forward(x, params)
    assert out.shape == (N, Cout, H, W), out.shape
    np.testing.assert_allclose(np.asarray(out), np.asarray(ref), rtol=1e-4, atol=1e-4)
    print("KERNEL_OK")
</pallas_src>

<mosaic_0001>
module attributes {stable_mosaic.version = 11 : i64} {
  func.func @kernel(%arg0: i32, %arg1: memref<32x64xf32, #tpu.memory_space<vmem>>, %arg2: memref<32x128xf32, #tpu.memory_space<vmem>>, %arg3: memref<3x64x128xf32, #tpu.memory_space<vmem>>, %arg4: memref<3x128x128xf32, #tpu.memory_space<vmem>>, %arg5: memref<1x64xf32, #tpu.memory_space<vmem>>, %arg6: memref<1x64xf32, #tpu.memory_space<vmem>>, %arg7: memref<1x128xf32, #tpu.memory_space<vmem>>, %arg8: memref<1x128xf32, #tpu.memory_space<vmem>>, %arg9: memref<64x64xf32, #tpu.memory_space<vmem>>, %arg10: memref<128x128xf32, #tpu.memory_space<vmem>>, %arg11: memref<32x128xf32, #tpu.memory_space<vmem>>, %arg12: memref<36x64xf32, #tpu.memory_space<vmem>>, %arg13: memref<36x128xf32, #tpu.memory_space<vmem>>) attributes {dimension_semantics = [#tpu.dimension_semantics<arbitrary>], iteration_bounds = array<i64: 1>, scalar_prefetch = 0 : i64, scratch_operands = 2 : i64, tpu.core_type = #tpu.core_type<tc>, window_params = [{pipeline_mode = #tpu.pipeline_mode<synchronous>, transform_indices = @transform_0, window_bounds = array<i64: 32, 64>}, {pipeline_mode = #tpu.pipeline_mode<synchronous>, transform_indices = @transform_1, window_bounds = array<i64: 32, 128>}, {pipeline_mode = #tpu.pipeline_mode<synchronous>, transform_indices = @transform_2, window_bounds = array<i64: 3, 64, 128>}, {pipeline_mode = #tpu.pipeline_mode<synchronous>, transform_indices = @transform_3, window_bounds = array<i64: 3, 128, 128>}, {pipeline_mode = #tpu.pipeline_mode<synchronous>, transform_indices = @transform_4, window_bounds = array<i64: 1, 64>}, {pipeline_mode = #tpu.pipeline_mode<synchronous>, transform_indices = @transform_5, window_bounds = array<i64: 1, 64>}, {pipeline_mode = #tpu.pipeline_mode<synchronous>, transform_indices = @transform_6, window_bounds = array<i64: 1, 128>}, {pipeline_mode = #tpu.pipeline_mode<synchronous>, transform_indices = @transform_7, window_bounds = array<i64: 1, 128>}, {pipeline_mode = #tpu.pipeline_mode<synchronous>, transform_indices = @transform_8, window_bounds = array<i64: 64, 64>}, {pipeline_mode = #tpu.pipeline_mode<synchronous>, transform_indices = @transform_9, window_bounds = array<i64: 128, 128>}, {pipeline_mode = #tpu.pipeline_mode<synchronous>, transform_indices = @transform_10, window_bounds = array<i64: 32, 128>}]} {
    %c0 = arith.constant 0 : index
    %c0_0 = arith.constant 0 : index
    %0 = vector.load %arg1[%c0, %c0_0] : memref<32x64xf32, #tpu.memory_space<vmem>>, vector<32x64xf32>
    %c0_1 = arith.constant 0 : index
    %c0_2 = arith.constant 0 : index
    %1 = vector.load %arg9[%c0_1, %c0_2] : memref<64x64xf32, #tpu.memory_space<vmem>>, vector<64x64xf32>
    %cst = arith.constant dense<0.000000e+00> : vector<32x64xf32>
    %2 = tpu.matmul %0, %1, %cst {dimension_numbers = #tpu.dot_dimension_numbers<[1], [0], [0], [1], [0, 0, 1, 1], [], []>} : vector<32x64xf32>, vector<64x64xf32>, vector<32x64xf32> -> vector<32x64xf32>
    %cst_3 = arith.constant dense<0.000000e+00> : vector<64xf32>
    %3 = vector.multi_reduction <add>, %2, %cst_3 [0] : vector<32x64xf32> to vector<64xf32>
    %4 = vector.shape_cast %3 : vector<64xf32> to vector<1x64xf32>
    %cst_4 = arith.constant 0.001953125 : f32
    %5 = vector.broadcast %cst_4 : f32 to vector<1x64xf32>
    %6 = arith.mulf %4, %5 : vector<1x64xf32>
    %7 = vector.broadcast %6 : vector<1x64xf32> to vector<32x64xf32>
    %8 = arith.subf %0, %7 : vector<32x64xf32>
    %9 = arith.mulf %8, %8 : vector<32x64xf32>
    %c0_5 = arith.constant 0 : index
    %c0_6 = arith.constant 0 : index
    %10 = vector.load %arg9[%c0_5, %c0_6] : memref<64x64xf32, #tpu.memory_space<vmem>>, vector<64x64xf32>
    %cst_7 = arith.constant dense<0.000000e+00> : vector<32x64xf32>
    %11 = tpu.matmul %9, %10, %cst_7 {dimension_numbers = #tpu.dot_dimension_numbers<[1], [0], [0], [1], [0, 0, 1, 1], [], []>} : vector<32x64xf32>, vector<64x64xf32>, vector<32x64xf32> -> vector<32x64xf32>
    %cst_8 = arith.constant dense<0.000000e+00> : vector<64xf32>
    %12 = vector.multi_reduction <add>, %11, %cst_8 [0] : vector<32x64xf32> to vector<64xf32>
    %13 = vector.shape_cast %12 : vector<64xf32> to vector<1x64xf32>
    %cst_9 = arith.constant 0.001953125 : f32
    %14 = vector.broadcast %cst_9 : f32 to vector<1x64xf32>
    %15 = arith.mulf %13, %14 : vector<1x64xf32>
    %c0_10 = arith.constant 0 : index
    %c0_11 = arith.constant 0 : index
    %16 = vector.load %arg5[%c0_10, %c0_11] : memref<1x64xf32, #tpu.memory_space<vmem>>, vector<1x64xf32>
    %cst_12 = arith.constant 9.99999974E-6 : f32
    %17 = vector.broadcast %cst_12 : f32 to vector<1x64xf32>
    %18 = arith.addf %15, %17 : vector<1x64xf32>
    %19 = math.rsqrt %18 : vector<1x64xf32>
    %20 = arith.mulf %16, %19 : vector<1x64xf32>
    %c0_13 = arith.constant 0 : index
    %c0_14 = arith.constant 0 : index
    %21 = vector.load %arg6[%c0_13, %c0_14] : memref<1x64xf32, #tpu.memory_space<vmem>>, vector<1x64xf32>
    %22 = arith.mulf %6, %20 : vector<1x64xf32>
    %23 = arith.subf %21, %22 : vector<1x64xf32>
    %24 = vector.broadcast %20 : vector<1x64xf32> to vector<32x64xf32>
    %25 = arith.mulf %0, %24 : vector<32x64xf32>
    %26 = vector.broadcast %23 : vector<1x64xf32> to vector<32x64xf32>
    %27 = arith.addf %25, %26 : vector<32x64xf32>
    %cst_15 = arith.constant 0.000000e+00 : f32
    %28 = vector.broadcast %cst_15 : f32 to vector<32x64xf32>
    %29 = arith.maximumf %27, %28 : vector<32x64xf32>
    %cst_16 = arith.constant 0.000000e+00 : f32
    %30 = vector.broadcast %cst_16 : f32 to vector<36x64xf32>
    %c0_17 = arith.constant 0 : index
    %c0_18 = arith.constant 0 : index
    %31 = vector.load %arg12[%c0_17, %c0_18] : memref<36x64xf32, #tpu.memory_space<vmem>>, vector<36x64xf32>
    tpu.vector_store %arg12[%c0_17, %c0_18], %30 {strides = array<i32>} : memref<36x64xf32, #tpu.memory_space<vmem>>, vector<36x64xf32>,
    %32 = vector.extract_strided_slice %29 {offsets = [0, 0], sizes = [16, 64], strides = [1, 1]} : vector<32x64xf32> to vector<16x64xf32>
    %c1 = arith.constant 1 : index
    %c0_19 = arith.constant 0 : index
    %33 = vector.load %arg12[%c1, %c0_19] : memref<36x64xf32, #tpu.memory_space<vmem>>, vector<16x64xf32>
    tpu.vector_store %arg12[%c1, %c0_19], %32 {strides = array<i32>} : memref<36x64xf32, #tpu.memory_space<vmem>>, vector<16x64xf32>,
    %34 = vector.extract_strided_slice %29 {offsets = [16, 0], sizes = [16, 64], strides = [1, 1]} : vector<32x64xf32> to vector<16x64xf32>
    %c19 = arith.constant 19 : index
    %c0_20 = arith.constant 0 : index
    %35 = vector.load %arg12[%c19, %c0_20] : memref<36x64xf32, #tpu.memory_space<vmem>>, vector<16x64xf32>
    tpu.vector_store %arg12[%c19, %c0_20], %34 {strides = array<i32>} : memref<36x64xf32, #tpu.memory_space<vmem>>, vector<16x64xf32>,
    %cst_21 = arith.constant 0.000000e+00 : f32
    %36 = vector.broadcast %cst_21 : f32 to vector<34x128xf32>
    %c0_22 = arith.constant 0 : index
    %c0_23 = arith.constant 0 : index
    %37 = vector.load %arg12[%c0_22, %c0_23] : memref<36x64xf32, #tpu.memory_space<vmem>>, vector<34x64xf32>
    %c0_24 = arith.constant 0 : index
    %c0_25 = arith.constant 0 : index
    %c0_26 = arith.constant 0 : index
    %38 = vector.load %arg3[%c0_24, %c0_25, %c0_26] : memref<3x64x128xf32, #tpu.memory_space<vmem>>, vector<1x64x128xf32>
    %39 = vector.shape_cast %38 : vector<1x64x128xf32> to vector<64x128xf32>
    %cst_27 = arith.constant dense<0.000000e+00> : vector<34x128xf32>
    %40 = tpu.matmul %37, %39, %cst_27 {dimension_numbers = #tpu.dot_dimension_numbers<[1], [0], [0], [1], [0, 0, 1, 1], [], []>} : vector<34x64xf32>, vector<64x128xf32>, vector<34x128xf32> -> vector<34x128xf32>
    %41 = arith.addf %36, %40 : vector<34x128xf32>
    %c1_28 = arith.constant 1 : index
    %c0_29 = arith.constant 0 : index
    %42 = vector.load %arg12[%c1_28, %c0_29] : memref<36x64xf32, #tpu.memory_space<vmem>>, vector<34x64xf32>
    %c1_30 = arith.constant 1 : index
    %c0_31 = arith.constant 0 : index
    %c0_32 = arith.constant 0 : index
    %43 = vector.load %arg3[%c1_30, %c0_31, %c0_32] : memref<3x64x128xf32, #tpu.memory_space<vmem>>, vector<1x64x128xf32>
    %44 = vector.shape_cast %43 : vector<1x64x128xf32> to vector<64x128xf32>
    %cst_33 = arith.constant dense<0.000000e+00> : vector<34x128xf32>
    %45 = tpu.matmul %42, %44, %cst_33 {dimension_numbers = #tpu.dot_dimension_numbers<[1], [0], [0], [1], [0, 0, 1, 1], [], []>} : vector<34x64xf32>, vector<64x128xf32>, vector<34x128xf32> -> vector<34x128xf32>
    %46 = arith.addf %41, %45 : vector<34x128xf32>
    %c2 = arith.constant 2 : index
    %c0_34 = arith.constant 0 : index
    %47 = vector.load %arg12[%c2, %c0_34] : memref<36x64xf32, #tpu.memory_space<vmem>>, vector<34x64xf32>
    %c2_35 = arith.constant 2 : index
    %c0_36 = arith.constant 0 : index
    %c0_37 = arith.constant 0 : index
    %48 = vector.load %arg3[%c2_35, %c0_36, %c0_37] : memref<3x64x128xf32, #tpu.memory_space<vmem>>, vector<1x64x128xf32>
    %49 = vector.shape_cast %48 : vector<1x64x128xf32> to vector<64x128xf32>
    %cst_38 = arith.constant dense<0.000000e+00> : vector<34x128xf32>
    %50 = tpu.matmul %47, %49, %cst_38 {dimension_numbers = #tpu.dot_dimension_numbers<[1], [0], [0], [1], [0, 0, 1, 1], [], []>} : vector<34x64xf32>, vector<64x128xf32>, vector<34x128xf32> -> vector<34x128xf32>
    %51 = arith.addf %46, %50 : vector<34x128xf32>
    %cst_39 = arith.constant 0.000000e+00 : f32
    %52 = vector.broadcast %cst_39 : f32 to vector<1x128xf32>
    %53 = vector.extract_strided_slice %51 {offsets = [0, 0], sizes = [16, 128], strides = [1, 1]} : vector<34x128xf32> to vector<16x128xf32>
    %c0_40 = arith.constant 0 : index
    %c0_41 = arith.constant 0 : index
    %54 = vector.load %arg10[%c0_40, %c0_41] : memref<128x128xf32, #tpu.memory_space<vmem>>, vector<128x128xf32>
    %cst_42 = arith.constant dense<0.000000e+00> : vector<16x128xf32>
    %55 = tpu.matmul %53, %54, %cst_42 {dimension_numbers = #tpu.dot_dimension_numbers<[1], [0], [0], [1], [0, 0, 1, 1], [], []>} : vector<16x128xf32>, vector<128x128xf32>, vector<16x128xf32> -> vector<16x128xf32>
    %cst_43 = arith.constant dense<0.000000e+00> : vector<128xf32>
    %56 = vector.multi_reduction <add>, %55, %cst_43 [0] : vector<16x128xf32> to vector<128xf32>
    %57 = vector.shape_cast %56 : vector<128xf32> to vector<1x128xf32>
    %58 = arith.addf %52, %57 : vector<1x128xf32>
    %59 = vector.extract_strided_slice %51 {offsets = [18, 0], sizes = [16, 128], strides = [1, 1]} : vector<34x128xf32> to vector<16x128xf32>
    %c0_44 = arith.constant 0 : index
    %c0_45 = arith.constant 0 : index
    %60 = vector.load %arg10[%c0_44, %c0_45] : memref<128x128xf32, #tpu.memory_space<vmem>>, vector<128x128xf32>
    %cst_46 = arith.constant dense<0.000000e+00> : vector<16x128xf32>
    %61 = tpu.matmul %59, %60, %cst_46 {dimension_numbers = #tpu.dot_dimension_numbers<[1], [0], [0], [1], [0, 0, 1, 1], [], []>} : vector<16x128xf32>, vector<128x128xf32>, vector<16x128xf32> -> vector<16x128xf32>
    %cst_47 = arith.constant dense<0.000000e+00> : vector<128xf32>
    %62 = vector.multi_reduction <add>, %61, %cst_47 [0] : vector<16x128xf32> to vector<128xf32>
    %63 = vector.shape_cast %62 : vector<128xf32> to vector<1x128xf32>
    %64 = arith.addf %58, %63 : vector<1x128xf32>
    %cst_48 = arith.constant 0.001953125 : f32
    %65 = vector.broadcast %cst_48 : f32 to vector<1x128xf32>
    %66 = arith.mulf %64, %65 : vector<1x128xf32>
    %cst_49 = arith.constant 0.000000e+00 : f32
    %67 = vector.broadcast %cst_49 : f32 to vector<1x128xf32>
    %68 = vector.extract_strided_slice %51 {offsets = [0, 0], sizes = [16, 128], strides = [1, 1]} : vector<34x128xf32> to vector<16x128xf32>
    %69 = vector.broadcast %66 : vector<1x128xf32> to vector<16x128xf32>
    %70 = arith.subf %68, %69 : vector<16x128xf32>
    %71 = arith.mulf %70, %70 : vector<16x128xf32>
    %c0_50 = arith.constant 0 : index
    %c0_51 = arith.constant 0 : index
    %72 = vector.load %arg10[%c0_50, %c0_51] : memref<128x128xf32, #tpu.memory_space<vmem>>, vector<128x128xf32>
    %cst_52 = arith.constant dense<0.000000e+00> : vector<16x128xf32>
    %73 = tpu.matmul %71, %72, %cst_52 {dimension_numbers = #tpu.dot_dimension_numbers<[1], [0], [0], [1], [0, 0, 1, 1], [], []>} : vector<16x128xf32>, vector<128x128xf32>, vector<16x128xf32> -> vector<16x128xf32>
    %cst_53 = arith.constant dense<0.000000e+00> : vector<128xf32>
    %74 = vector.multi_reduction <add>, %73, %cst_53 [0] : vector<16x128xf32> to vector<128xf32>
    %75 = vector.shape_cast %74 : vector<128xf32> to vector<1x128xf32>
    %76 = arith.addf %67, %75 : vector<1x128xf32>
    %77 = vector.extract_strided_slice %51 {offsets = [18, 0], sizes = [16, 128], strides = [1, 1]} : vector<34x128xf32> to vector<16x128xf32>
    %78 = vector.broadcast %66 : vector<1x128xf32> to vector<16x128xf32>
    %79 = arith.subf %77, %78 : vector<16x128xf32>
    %80 = arith.mulf %79, %79 : vector<16x128xf32>
    %c0_54 = arith.constant 0 : index
    %c0_55 = arith.constant 0 : index
    %81 = vector.load %arg10[%c0_54, %c0_55] : memref<128x128xf32, #tpu.memory_space<vmem>>, vector<128x128xf32>
    %cst_56 = arith.constant dense<0.000000e+00> : vector<16x128xf32>
    %82 = tpu.matmul %80, %81, %cst_56 {dimension_numbers = #tpu.dot_dimension_numbers<[1], [0], [0], [1], [0, 0, 1, 1], [], []>} : vector<16x128xf32>, vector<128x128xf32>, vector<16x128xf32> -> vector<16x128xf32>
    %cst_57 = arith.constant dense<0.000000e+00> : vector<128xf32>
    %83 = vector.multi_reduction <add>, %82, %cst_57 [0] : vector<16x128xf32> to vector<128xf32>
    %84 = vector.shape_cast %83 : vector<128xf32> to vector<1x128xf32>
    %85 = arith.addf %76, %84 : vector<1x128xf32>
    %cst_58 = arith.constant 0.001953125 : f32
    %86 = vector.broadcast %cst_58 : f32 to vector<1x128xf32>
    %87 = arith.mulf %85, %86 : vector<1x128xf32>
    %c0_59 = arith.constant 0 : index
    %c0_60 = arith.constant 0 : index
    %88 = vector.load %arg7[%c0_59, %c0_60] : memref<1x128xf32, #tpu.memory_space<vmem>>, vector<1x128xf32>
    %cst_61 = arith.constant 9.99999974E-6 : f32
    %89 = vector.broadcast %cst_61 : f32 to vector<1x128xf32>
    %90 = arith.addf %87, %89 : vector<1x128xf32>
    %91 = math.rsqrt %90 : vector<1x128xf32>
    %92 = arith.mulf %88, %91 : vector<1x128xf32>
    %c0_62 = arith.constant 0 : index
    %c0_63 = arith.constant 0 : index
    %93 = vector.load %arg8[%c0_62, %c0_63] : memref<1x128xf32, #tpu.memory_space<vmem>>, vector<1x128xf32>
    %94 = arith.mulf %66, %92 : vector<1x128xf32>
    %95 = arith.subf %93, %94 : vector<1x128xf32>
    %96 = vector.broadcast %92 : vector<1x128xf32> to vector<34x128xf32>
    %97 = arith.mulf %51, %96 : vector<34x128xf32>
    %98 = vector.broadcast %95 : vector<1x128xf32> to vector<34x128xf32>
    %99 = arith.addf %97, %98 : vector<34x128xf32>
    %cst_64 = arith.constant 0.000000e+00 : f32
    %100 = vector.broadcast %cst_64 : f32 to vector<34x128xf32>
    %101 = arith.maximumf %99, %100 : vector<34x128xf32>
    %cst_65 = arith.constant 0.000000e+00 : f32
    %102 = vector.broadcast %cst_65 : f32 to vector<36x128xf32>
    %c0_66 = arith.constant 0 : index
    %c0_67 = arith.constant 0 : index
    %103 = vector.load %arg13[%c0_66, %c0_67] : memref<36x128xf32, #tpu.memory_space<vmem>>, vector<36x128xf32>
    tpu.vector_store %arg13[%c0_66, %c0_67], %102 {strides = array<i32>} : memref<36x128xf32, #tpu.memory_space<vmem>>, vector<36x128xf32>,
    %104 = vector.extract_strided_slice %101 {offsets = [0, 0], sizes = [16, 128], strides = [1, 1]} : vector<34x128xf32> to vector<16x128xf32>
    %c1_68 = arith.constant 1 : index
    %c0_69 = arith.constant 0 : index
    %105 = vector.load %arg13[%c1_68, %c0_69] : memref<36x128xf32, #tpu.memory_space<vmem>>, vector<16x128xf32>
    tpu.vector_store %arg13[%c1_68, %c0_69], %104 {strides = array<i32>} : memref<36x128xf32, #tpu.memory_space<vmem>>, vector<16x128xf32>,
    %106 = vector.extract_strided_slice %101 {offsets = [18, 0], sizes = [16, 128], strides = [1, 1]} : vector<34x128xf32> to vector<16x128xf32>
    %c19_70 = arith.constant 19 : index
    %c0_71 = arith.constant 0 : index
    %107 = vector.load %arg13[%c19_70, %c0_71] : memref<36x128xf32, #tpu.memory_space<vmem>>, vector<16x128xf32>
    tpu.vector_store %arg13[%c19_70, %c0_71], %106 {strides = array<i32>} : memref<36x128xf32, #tpu.memory_space<vmem>>, vector<16x128xf32>,
    %cst_72 = arith.constant 0.000000e+00 : f32
    %108 = vector.broadcast %cst_72 : f32 to vector<34x128xf32>
    %c0_73 = arith.constant 0 : index
    %c0_74 = arith.constant 0 : index
    %109 = vector.load %arg13[%c0_73, %c0_74] : memref<36x128xf32, #tpu.memory_space<vmem>>, vector<34x128xf32>
    %c0_75 = arith.constant 0 : index
    %c0_76 = arith.constant 0 : index
    %c0_77 = arith.constant 0 : index
    %110 = vector.load %arg4[%c0_75, %c0_76, %c0_77] : memref<3x128x128xf32, #tpu.memory_space<vmem>>, vector<1x128x128xf32>
    %111 = vector.shape_cast %110 : vector<1x128x128xf32> to vector<128x128xf32>
    %cst_78 = arith.constant dense<0.000000e+00> : vector<34x128xf32>
    %112 = tpu.matmul %109, %111, %cst_78 {dimension_numbers = #tpu.dot_dimension_numbers<[1], [0], [0], [1], [0, 0, 1, 1], [], []>} : vector<34x128xf32>, vector<128x128xf32>, vector<34x128xf32> -> vector<34x128xf32>
    %113 = arith.addf %108, %112 : vector<34x128xf32>
    %c1_79 = arith.constant 1 : index
    %c0_80 = arith.constant 0 : index
    %114 = vector.load %arg13[%c1_79, %c0_80] : memref<36x128xf32, #tpu.memory_space<vmem>>, vector<34x128xf32>
    %c1_81 = arith.constant 1 : index
    %c0_82 = arith.constant 0 : index
    %c0_83 = arith.constant 0 : index
    %115 = vector.load %arg4[%c1_81, %c0_82, %c0_83] : memref<3x128x128xf32, #tpu.memory_space<vmem>>, vector<1x128x128xf32>
    %116 = vector.shape_cast %115 : vector<1x128x128xf32> to vector<128x128xf32>
    %cst_84 = arith.constant dense<0.000000e+00> : vector<34x128xf32>
    %117 = tpu.matmul %114, %116, %cst_84 {dimension_numbers = #tpu.dot_dimension_numbers<[1], [0], [0], [1], [0, 0, 1, 1], [], []>} : vector<34x128xf32>, vector<128x128xf32>, vector<34x128xf32> -> vector<34x128xf32>
    %118 = arith.addf %113, %117 : vector<34x128xf32>
    %c2_85 = arith.constant 2 : index
    %c0_86 = arith.constant 0 : index
    %119 = vector.load %arg13[%c2_85, %c0_86] : memref<36x128xf32, #tpu.memory_space<vmem>>, vector<34x128xf32>
    %c2_87 = arith.constant 2 : index
    %c0_88 = arith.constant 0 : index
    %c0_89 = arith.constant 0 : index
    %120 = vector.load %arg4[%c2_87, %c0_88, %c0_89] : memref<3x128x128xf32, #tpu.memory_space<vmem>>, vector<1x128x128xf32>
    %121 = vector.shape_cast %120 : vector<1x128x128xf32> to vector<128x128xf32>
    %cst_90 = arith.constant dense<0.000000e+00> : vector<34x128xf32>
    %122 = tpu.matmul %119, %121, %cst_90 {dimension_numbers = #tpu.dot_dimension_numbers<[1], [0], [0], [1], [0, 0, 1, 1], [], []>} : vector<34x128xf32>, vector<128x128xf32>, vector<34x128xf32> -> vector<34x128xf32>
    %123 = arith.addf %118, %122 : vector<34x128xf32>
    %124 = vector.extract_strided_slice %123 {offsets = [0, 0], sizes = [16, 128], strides = [1, 1]} : vector<34x128xf32> to vector<16x128xf32>
    %c0_91 = arith.constant 0 : index
    %c0_92 = arith.constant 0 : index
    %125 = vector.load %arg2[%c0_91, %c0_92] : memref<32x128xf32, #tpu.memory_space<vmem>>, vector<16x128xf32>
    %126 = arith.addf %124, %125 : vector<16x128xf32>
    %c0_93 = arith.constant 0 : index
    %c0_94 = arith.constant 0 : index
    %127 = vector.load %arg11[%c0_93, %c0_94] : memref<32x128xf32, #tpu.memory_space<vmem>>, vector<16x128xf32>
    tpu.vector_store %arg11[%c0_93, %c0_94], %126 {strides = array<i32>} : memref<32x128xf32, #tpu.memory_space<vmem>>, vector<16x128xf32>,
    %128 = vector.extract_strided_slice %123 {offsets = [18, 0], sizes = [16, 128], strides = [1, 1]} : vector<34x128xf32> to vector<16x128xf32>
    %c16 = arith.constant 16 : index
    %c0_95 = arith.constant 0 : index
    %129 = vector.load %arg2[%c16, %c0_95] : memref<32x128xf32, #tpu.memory_space<vmem>>, vector<16x128xf32>
    %130 = arith.addf %128, %129 : vector<16x128xf32>
    %c16_96 = arith.constant 16 : index
    %c0_97 = arith.constant 0 : index
    %131 = vector.load %arg11[%c16_96, %c0_97] : memref<32x128xf32, #tpu.memory_space<vmem>>, vector<16x128xf32>
    tpu.vector_store %arg11[%c16_96, %c0_97], %130 {strides = array<i32>} : memref<32x128xf32, #tpu.memory_space<vmem>>, vector<16x128xf32>,
    return
  }
  func.func @transform_0(%arg0: i32) -> (i32, i32) {
    %c0_i32 = arith.constant 0 : i32
    %c0_i32_0 = arith.constant 0 : i32
    %c0_i32_1 = arith.constant 0 : i32
    return %c0_i32, %c0_i32_0 : i32, i32
  }
  func.func @transform_1(%arg0: i32) -> (i32, i32) {
    %c0_i32 = arith.constant 0 : i32
    %c0_i32_0 = arith.constant 0 : i32
    %c0_i32_1 = arith.constant 0 : i32
    return %c0_i32, %c0_i32_0 : i32, i32
  }
  func.func @transform_2(%arg0: i32) -> (i32, i32, i32) {
    %c0_i32 = arith.constant 0 : i32
    %c0_i32_0 = arith.constant 0 : i32
    %c0_i32_1 = arith.constant 0 : i32
    %c0_i32_2 = arith.constant 0 : i32
    return %c0_i32, %c0_i32_0, %c0_i32_1 : i32, i32, i32
  }
  func.func @transform_3(%arg0: i32) -> (i32, i32, i32) {
    %c0_i32 = arith.constant 0 : i32
    %c0_i32_0 = arith.constant 0 : i32
    %c0_i32_1 = arith.constant 0 : i32
    %c0_i32_2 = arith.constant 0 : i32
    return %c0_i32, %c0_i32_0, %c0_i32_1 : i32, i32, i32
  }
  func.func @transform_4(%arg0: i32) -> (i32, i32) {
    %c0_i32 = arith.constant 0 : i32
    %c0_i32_0 = arith.constant 0 : i32
    %c0_i32_1 = arith.constant 0 : i32
    return %c0_i32, %c0_i32_0 : i32, i32
  }
  func.func @transform_5(%arg0: i32) -> (i32, i32) {
    %c0_i32 = arith.constant 0 : i32
    %c0_i32_0 = arith.constant 0 : i32
    %c0_i32_1 = arith.constant 0 : i32
    return %c0_i32, %c0_i32_0 : i32, i32
  }
  func.func @transform_6(%arg0: i32) -> (i32, i32) {
    %c0_i32 = arith.constant 0 : i32
    %c0_i32_0 = arith.constant 0 : i32
    %c0_i32_1 = arith.constant 0 : i32
    return %c0_i32, %c0_i32_0 : i32, i32
  }
  func.func @transform_7(%arg0: i32) -> (i32, i32) {
    %c0_i32 = arith.constant 0 : i32
    %c0_i32_0 = arith.constant 0 : i32
    %c0_i32_1 = arith.constant 0 : i32
    return %c0_i32, %c0_i32_0 : i32, i32
  }
  func.func @transform_8(%arg0: i32) -> (i32, i32) {
    %c0_i32 = arith.constant 0 : i32
    %c0_i32_0 = arith.constant 0 : i32
    %c0_i32_1 = arith.constant 0 : i32
    return %c0_i32, %c0_i32_0 : i32, i32
  }
  func.func @transform_9(%arg0: i32) -> (i32, i32) {
    %c0_i32 = arith.constant 0 : i32
    %c0_i32_0 = arith.constant 0 : i32
    %c0_i32_1 = arith.constant 0 : i32
    return %c0_i32, %c0_i32_0 : i32, i32
  }
  func.func @transform_10(%arg0: i32) -> (i32, i32) {
    %c0_i32 = arith.constant 0 : i32
    %c0_i32_0 = arith.constant 0 : i32
    %c0_i32_1 = arith.constant 0 : i32
    return %c0_i32, %c0_i32_0 : i32, i32
  }
}

</mosaic_0001>

<llo_original>
// kernel: tile.23
$region0: #{tile.23}
  #allocation0 [shape = 's32[1]{0}', space=sflag, size = 0x4, scoped, tag = 'scoped memory for tile.23']
  %s0 = inlined_call_operand.vmem [shape: f32[4], index: 0, kind: input, shape index: {}]
  %s1 = inlined_call_operand.vmem [shape: f32[16,4], index: 1, kind: output, shape index: {}]
  // Predicated region
  $region2: #{tile.23} parent=0 // pred_check
    _
  $region3: #{tile.23} parent=0 // pred_check_branch
    %3 = sbr.rel (0) target = $region5
  $region4: #{tile.23} parent=0 // pred_region
    _
  $region5: #{tile.23} parent=0 // pred_fallthru
    _
  %v4 = vld [vmem:[%s0] ss:$0 sm:$0xff]
  %5 = vst [vmem:[%s1] sm:$0xff] %v4
  %s6 = scalar_lea.vmem %s1, 8
  %7 = vst [vmem:[%s6] sm:$0xff] %v4

// kernel: tile.24
$region0: #{tile.24}
  %s0 = inlined_call_operand.vmem [shape: f32[16,4], index: 0, kind: input, shape index: {}]
  %s1 = inlined_call_operand.vmem [shape: f32[1,64], index: 1, kind: output, shape index: {}]
  $region1: #{tile.24} parent=0
    #allocation0 [shape = 'u8[4096]{0}', space=vmem, size = 0x1000, scoped, tag = 'scoped mem for output reshape']
    %v2 = vld [vmem:[%s0] sm:$0x1]
    %vm3 = vcmask 31744
    %4 = vst.msk [vmem:[#allocation0] sm:$0x1] %vm3, %v2
    %s5 = scalar_lea.vmem %s0, 15
    %v6 = vld [vmem:[%s5] sm:$0x1]
    %7 = vrot.lane.b32.xlu0 %v6, 60
    %v8 = vpop.permute.xlu0 %7
    %vm9 = vcmask 523744
    %10 = vst.msk [vmem:[#allocation0] sm:$0x1] %vm9, %v8
    %s11 = scalar_lea.vmem %s0, 14
    %v12 = vld [vmem:[%s11] sm:$0x1]
    %13 = vrot.lane.b32.xlu0 %v12, 56
    %v14 = vpop.permute.xlu0 %13
    %vm15 = vcmask 490944
    %16 = vst.msk [vmem:[#allocation0] sm:$0x1] %vm15, %v14
    %s17 = scalar_lea.vmem %s0, 13
    %v18 = vld [vmem:[%s17] sm:$0x1]
    %19 = vrot.lane.b32.xlu0 %v18, 52
    %v20 = vpop.permute.xlu0 %19
    %vm21 = vcmask 458144
    %22 = vst.msk [vmem:[#allocation0] sm:$0x1] %vm21, %v20
    %s23 = scalar_lea.vmem %s0, 12
    %v24 = vld [vmem:[%s23] sm:$0x1]
    %25 = vrot.lane.b32.xlu0 %v24, 48
    %v26 = vpop.permute.xlu0 %25
    %vm27 = vcmask 425344
    %28 = vst.msk [vmem:[#allocation0] sm:$0x1] %vm27, %v26
    %s29 = scalar_lea.vmem %s0, 11
    %v30 = vld [vmem:[%s29] sm:$0x1]
    %31 = vrot.lane.b32.xlu0 %v30, 44
    %v32 = vpop.permute.xlu0 %31
    %vm33 = vcmask 392544
    %34 = vst.msk [vmem:[#allocation0] sm:$0x1] %vm33, %v32
    %s35 = scalar_lea.vmem %s0, 10
    %v36 = vld [vmem:[%s35] sm:$0x1]
    %37 = vrot.lane.b32.xlu0 %v36, 40
    %v38 = vpop.permute.xlu0 %37
    %vm39 = vcmask 359744
    %40 = vst.msk [vmem:[#allocation0] sm:$0x1] %vm39, %v38
    %s41 = scalar_lea.vmem %s0, 9
    %v42 = vld [vmem:[%s41] sm:$0x1]
    %43 = vrot.lane.b32.xlu0 %v42, 36
    %v44 = vpop.permute.xlu0 %43
    %vm45 = vcmask 326944
    %46 = vst.msk [vmem:[#allocation0] sm:$0x1] %vm45, %v44
    %s47 = scalar_lea.vmem %s0, 8
    %v48 = vld [vmem:[%s47] sm:$0x1]
    %49 = vrot.lane.b32.xlu0 %v48, 32
    %v50 = vpop.permute.xlu0 %49
    %vm51 = vcmask 294144
    %52 = vst.msk [vmem:[#allocation0] sm:$0x1] %vm51, %v50
    %s53 = scalar_lea.vmem %s0, 7
    %v54 = vld [vmem:[%s53] sm:$0x1]
    %55 = vrot.lane.b32.xlu0 %v54, 28
    %v56 = vpop.permute.xlu0 %55
    %vm57 = vcmask 261344
    %58 = vst.msk [vmem:[#allocation0] sm:$0x1] %vm57, %v56
    %s59 = scalar_lea.vmem %s0, 6
    %v60 = vld [vmem:[%s59] sm:$0x1]
    %61 = vrot.lane.b32.xlu0 %v60, 24
    %v62 = vpop.permute.xlu0 %61
    %vm63 = vcmask 228544
    %64 = vst.msk [vmem:[#allocation0] sm:$0x1] %vm63, %v62
    %s65 = scalar_lea.vmem %s0, 5
    %v66 = vld [vmem:[%s65] sm:$0x1]
    %67 = vrot.lane.b32.xlu0 %v66, 20
    %v68 = vpop.permute.xlu0 %67
    %vm69 = vcmask 195744
    %70 = vst.msk [vmem:[#allocation0] sm:$0x1] %vm69, %v68
    %s71 = scalar_lea.vmem %s0, 4
    %v72 = vld [vmem:[%s71] sm:$0x1]
    %73 = vrot.lane.b32.xlu0 %v72, 16
    %v74 = vpop.permute.xlu0 %73
    %vm75 = vcmask 162944
    %76 = vst.msk [vmem:[#allocation0] sm:$0x1] %vm75, %v74
    %s77 = scalar_lea.vmem %s0, 3
    %v78 = vld [vmem:[%s77] sm:$0x1]
    %79 = vrot.lane.b32.xlu0 %v78, 12
    %v80 = vpop.permute.xlu0 %79
    %vm81 = vcmask 130144
    %82 = vst.msk [vmem:[#allocation0] sm:$0x1] %vm81, %v80
    %s83 = scalar_lea.vmem %s0, 2
    %v84 = vld [vmem:[%s83] sm:$0x1]
    %85 = vrot.lane.b32.xlu0 %v84, 8
    %v86 = vpop.permute.xlu0 %85
    %vm87 = vcmask 97344
    %88 = vst.msk [vmem:[#allocation0] sm:$0x1] %vm87, %v86
    %s89 = scalar_lea.vmem %s0, 1
    %v90 = vld [vmem:[%s89] sm:$0x1]
    %91 = vrot.lane.b32.xlu0 %v90, 4
    %v92 = vpop.permute.xlu0 %91
    %vm93 = vcmask 64544
    %94 = vst.msk [vmem:[#allocation0] sm:$0x1] %vm93, %v92
    %s96 = sshll.u32 1, 1
    %s97 = ssub.s32 %s96, 1
    %v99 = vld [vmem:[#allocation0] sm:%s97]
    %s100 = sshll.u32 1, 1
    %s101 = ssub.s32 %s100, 1
    %102 = vst [vmem:[%s1] sm:%s101] %v99

// kernel: tile.33
$region0: #{tile.33}
  #allocation0 [shape = 's32[1]{0}', space=sflag, size = 0x4, scoped, tag = 'scoped memory for tile.33']
  %s0 = inlined_call_operand.vmem [shape: f32[8], index: 0, kind: input, shape index: {}]
  %s1 = inlined_call_operand.vmem [shape: f32[16,8], index: 1, kind: output, shape index: {}]
  // Predicated region
  $region2: #{tile.33} parent=0 // pred_check
    _
  $region3: #{tile.33} parent=0 // pred_check_branch
    %3 = sbr.rel (0) target = $region5
  $region4: #{tile.33} parent=0 // pred_region
    _
  $region5: #{tile.33} parent=0 // pred_fallthru
    _
  %v4 = vld [vmem:[%s0] ss:$0 sm:$0xff]
  %5 = vst [vmem:[%s1] sm:$0xff] %v4
  %s6 = scalar_lea.vmem %s1, 8
  %7 = vst [vmem:[%s6] sm:$0xff] %v4

// kernel: tile.34
$region0: #{tile.34}
  %s0 = inlined_call_operand.vmem [shape: f32[16,8], index: 0, kind: input, shape index: {}]
  %s1 = inlined_call_operand.vmem [shape: f32[1,128], index: 1, kind: output, shape index: {}]
  $region1: #{tile.34} parent=0
    #allocation0 [shape = 'u8[4096]{0}', space=vmem, size = 0x1000, scoped, tag = 'scoped mem for output reshape']
    %v2 = vld [vmem:[%s0] sm:$0x1]
    %vm3 = vcmask 64512
    %4 = vst.msk [vmem:[#allocation0] sm:$0x1] %vm3, %v2
    %s5 = scalar_lea.vmem %s0, 15
    %v6 = vld [vmem:[%s5] sm:$0x1]
    %7 = vrot.lane.b32.xlu0 %v6, 120
    %v8 = vpop.permute.xlu0 %7
    %vm9 = vcmask 1048512
    %10 = vst.msk [vmem:[#allocation0] sm:$0x1] %vm9, %v8
    %s11 = scalar_lea.vmem %s0, 14
    %v12 = vld [vmem:[%s11] sm:$0x1]
    %13 = vrot.lane.b32.xlu0 %v12, 112
    %v14 = vpop.permute.xlu0 %13
    %vm15 = vcmask 982912
    %16 = vst.msk [vmem:[#allocation0] sm:$0x1] %vm15, %v14
    %s17 = scalar_lea.vmem %s0, 13
    %v18 = vld [vmem:[%s17] sm:$0x1]
    %19 = vrot.lane.b32.xlu0 %v18, 104
    %v20 = vpop.permute.xlu0 %19
    %vm21 = vcmask 917312
    %22 = vst.msk [vmem:[#allocation0] sm:$0x1] %vm21, %v20
    %s23 = scalar_lea.vmem %s0, 12
    %v24 = vld [vmem:[%s23] sm:$0x1]
    %25 = vrot.lane.b32.xlu0 %v24, 96
    %v26 = vpop.permute.xlu0 %25
    %vm27 = vcmask 851712
    %28 = vst.msk [vmem:[#allocation0] sm:$0x1] %vm27, %v26
    %s29 = scalar_lea.vmem %s0, 11
    %v30 = vld [vmem:[%s29] sm:$0x1]
    %31 = vrot.lane.b32.xlu0 %v30, 88
    %v32 = vpop.permute.xlu0 %31
    %vm33 = vcmask 786112
    %34 = vst.msk [vmem:[#allocation0] sm:$0x1] %vm33, %v32
    %s35 = scalar_lea.vmem %s0, 10
    %v36 = vld [vmem:[%s35] sm:$0x1]
    %37 = vrot.lane.b32.xlu0 %v36, 80
    %v38 = vpop.permute.xlu0 %37
    %vm39 = vcmask 720512
    %40 = vst.msk [vmem:[#allocation0] sm:$0x1] %vm39, %v38
    %s41 = scalar_lea.vmem %s0, 9
    %v42 = vld [vmem:[%s41] sm:$0x1]
    %43 = vrot.lane.b32.xlu0 %v42, 72
    %v44 = vpop.permute.xlu0 %43
    %vm45 = vcmask 654912
    %46 = vst.msk [vmem:[#allocation0] sm:$0x1] %vm45, %v44
    %s47 = scalar_lea.vmem %s0, 8
    %v48 = vld [vmem:[%s47] sm:$0x1]
    %49 = vrot.lane.b32.xlu0 %v48, 64
    %v50 = vpop.permute.xlu0 %49
    %vm51 = vcmask 589312
    %52 = vst.msk [vmem:[#allocation0] sm:$0x1] %vm51, %v50
    %s53 = scalar_lea.vmem %s0, 7
    %v54 = vld [vmem:[%s53] sm:$0x1]
    %55 = vrot.lane.b32.xlu0 %v54, 56
    %v56 = vpop.permute.xlu0 %55
    %vm57 = vcmask 523712
    %58 = vst.msk [vmem:[#allocation0] sm:$0x1] %vm57, %v56
    %s59 = scalar_lea.vmem %s0, 6
    %v60 = vld [vmem:[%s59] sm:$0x1]
    %61 = vrot.lane.b32.xlu0 %v60, 48
    %v62 = vpop.permute.xlu0 %61
    %vm63 = vcmask 458112
    %64 = vst.msk [vmem:[#allocation0] sm:$0x1] %vm63, %v62
    %s65 = scalar_lea.vmem %s0, 5
    %v66 = vld [vmem:[%s65] sm:$0x1]
    %67 = vrot.lane.b32.xlu0 %v66, 40
    %v68 = vpop.permute.xlu0 %67
    %vm69 = vcmask 392512
    %70 = vst.msk [vmem:[#allocation0] sm:$0x1] %vm69, %v68
    %s71 = scalar_lea.vmem %s0, 4
    %v72 = vld [vmem:[%s71] sm:$0x1]
    %73 = vrot.lane.b32.xlu0 %v72, 32
    %v74 = vpop.permute.xlu0 %73
    %vm75 = vcmask 326912
    %76 = vst.msk [vmem:[#allocation0] sm:$0x1] %vm75, %v74
    %s77 = scalar_lea.vmem %s0, 3
    %v78 = vld [vmem:[%s77] sm:$0x1]
    %79 = vrot.lane.b32.xlu0 %v78, 24
    %v80 = vpop.permute.xlu0 %79
    %vm81 = vcmask 261312
    %82 = vst.msk [vmem:[#allocation0] sm:$0x1] %vm81, %v80
    %s83 = scalar_lea.vmem %s0, 2
    %v84 = vld [vmem:[%s83] sm:$0x1]
    %85 = vrot.lane.b32.xlu0 %v84, 16
    %v86 = vpop.permute.xlu0 %85
    %vm87 = vcmask 195712
    %88 = vst.msk [vmem:[#allocation0] sm:$0x1] %vm87, %v86
    %s89 = scalar_lea.vmem %s0, 1
    %v90 = vld [vmem:[%s89] sm:$0x1]
    %91 = vrot.lane.b32.xlu0 %v90, 8
    %v92 = vpop.permute.xlu0 %91
    %vm93 = vcmask 130112
    %94 = vst.msk [vmem:[#allocation0] sm:$0x1] %vm93, %v92
    %s96 = sshll.u32 1, 1
    %s97 = ssub.s32 %s96, 1
    %v99 = vld [vmem:[#allocation0] sm:%s97]
    %s100 = sshll.u32 1, 1
    %s101 = ssub.s32 %s100, 1
    %102 = vst [vmem:[%s1] sm:%s101] %v99

// kernel: _lambda_.1
$region0: #{_lambda_.1}
  #allocation0 [shape = 'u32[]', space=smem, size = 0x4, offset = 0x4, fixed_abs, tag = 'smem constant byte address 0x4 - core index']
  #allocation1 [shape = 'u32[144,128]{1,0:T(1,128)}', space=vmem, size = 0x12000, scoped, tag = 'internal scratch']
  #allocation2 [shape = 'f32[36,64]{1,0:T(8,128)}', space=vmem, size = 0x5000, scoped, tag = 'scratch operand']
  #allocation3 [shape = 'f32[36,128]{1,0:T(8,128)}', space=vmem, size = 0x5000, scoped, tag = 'scratch operand']
  %s0 = inlined_call_operand.vmem [shape: f32[32,64], index: 0, kind: input, shape index: {}]
  %s1 = inlined_call_operand.vmem [shape: f32[32,128], index: 1, kind: input, shape index: {}]
  %s2 = inlined_call_operand.vmem [shape: f32[3,64,128], index: 2, kind: input, shape index: {}]
  %s3 = inlined_call_operand.vmem [shape: f32[3,128,128], index: 3, kind: input, shape index: {}]
  %s4 = inlined_call_operand.vmem [shape: f32[1,64], index: 4, kind: input, shape index: {}]
  %s5 = inlined_call_operand.vmem [shape: f32[1,64], index: 5, kind: input, shape index: {}]
  %s6 = inlined_call_operand.vmem [shape: f32[1,128], index: 6, kind: input, shape index: {}]
  %s7 = inlined_call_operand.vmem [shape: f32[1,128], index: 7, kind: input, shape index: {}]
  %s8 = inlined_call_operand.vmem [shape: f32[64,64], index: 8, kind: input, shape index: {}]
  %s9 = inlined_call_operand.vmem [shape: f32[128,128], index: 9, kind: input, shape index: {}]
  %s10 = inlined_call_operand.vmem [shape: f32[32,128], index: 10, kind: output, shape index: {}]
  %s11 = sld [smem:[#allocation0]]
  $region50: #{_lambda_.1} parent=0
    _
  %s13 = ssub.s32 1, %s11
  %s14 = scalar_select 0, %s13, %s11
  // Predicated region
  $region2: #{_lambda_.1} parent=0 // pred_check
    _
  $region3: #{_lambda_.1} parent=0 // pred_check_branch
    %16 = sbr.rel (0) target = $region5
  $region4: #{_lambda_.1} parent=0 // pred_region
    _
  $region5: #{_lambda_.1} parent=0 // pred_fallthru
    _
  // Predicated region
  $region6: #{_lambda_.1} parent=0 // pred_check
    _
  $region7: #{_lambda_.1} parent=0 // pred_check_branch
    %18 = sbr.rel (0) target = $region9
  $region8: #{_lambda_.1} parent=0 // pred_region
    _
  $region9: #{_lambda_.1} parent=0 // pred_fallthru
    _
  // Predicated region
  $region10: #{_lambda_.1} parent=0 // pred_check
    _
  $region11: #{_lambda_.1} parent=0 // pred_check_branch
    %20 = sbr.rel (0) target = $region13
  $region12: #{_lambda_.1} parent=0 // pred_region
    _
  $region13: #{_lambda_.1} parent=0 // pred_fallthru
    _
  // Predicated region
  $region14: #{_lambda_.1} parent=0 // pred_check
    _
  $region15: #{_lambda_.1} parent=0 // pred_check_branch
    %22 = sbr.rel (0) target = $region17
  $region16: #{_lambda_.1} parent=0 // pred_region
    _
  $region17: #{_lambda_.1} parent=0 // pred_fallthru
    _
  // Predicated region
  $region18: #{_lambda_.1} parent=0 // pred_check
    _
  $region19: #{_lambda_.1} parent=0 // pred_check_branch
    %24 = sbr.rel (0) target = $region21
  $region20: #{_lambda_.1} parent=0 // pred_region
    _
  $region21: #{_lambda_.1} parent=0 // pred_fallthru
    _
  // Predicated region
  $region22: #{_lambda_.1} parent=0 // pred_check
    _
  $region23: #{_lambda_.1} parent=0 // pred_check_branch
    %26 = sbr.rel (0) target = $region25
  $region24: #{_lambda_.1} parent=0 // pred_region
    _
  $region25: #{_lambda_.1} parent=0 // pred_fallthru
    _
  // Predicated region
  $region26: #{_lambda_.1} parent=0 // pred_check
    _
  $region27: #{_lambda_.1} parent=0 // pred_check_branch
    %28 = sbr.rel (0) target = $region29
  $region28: #{_lambda_.1} parent=0 // pred_region
    _
  $region29: #{_lambda_.1} parent=0 // pred_fallthru
    _
  // Predicated region
  $region30: #{_lambda_.1} parent=0 // pred_check
    _
  $region31: #{_lambda_.1} parent=0 // pred_check_branch
    %30 = sbr.rel (0) target = $region33
  $region32: #{_lambda_.1} parent=0 // pred_region
    _
  $region33: #{_lambda_.1} parent=0 // pred_fallthru
    _
  // Predicated region
  $region34: #{_lambda_.1} parent=0 // pred_check
    _
  $region35: #{_lambda_.1} parent=0 // pred_check_branch
    %32 = sbr.rel (0) target = $region37
  $region36: #{_lambda_.1} parent=0 // pred_region
    _
  $region37: #{_lambda_.1} parent=0 // pred_fallthru
    _
  // Predicated region
  $region38: #{_lambda_.1} parent=0 // pred_check
    _
  $region39: #{_lambda_.1} parent=0 // pred_check_branch
    %34 = sbr.rel (0) target = $region41
  $region40: #{_lambda_.1} parent=0 // pred_region
    _
  $region41: #{_lambda_.1} parent=0 // pred_fallthru
    _
  %v35 = vld [vmem:[%s0] sm:$0xff]
  %v36 = vld [vmem:[%s0 + $0x8] sm:$0xff]
  %v37 = vld [vmem:[%s0 + $0x10] sm:$0xff]
  %v38 = vld [vmem:[%s0 + $0x18] sm:$0xff]
  %v39 = vld [vmem:[%s8] sm:$0xff]
  %v40 = vld [vmem:[%s8 + $0x8] sm:$0xff]
  %v41 = vld [vmem:[%s8 + $0x10] sm:$0xff]
  %v42 = vld [vmem:[%s8 + $0x18] sm:$0xff]
  %v43 = vld [vmem:[%s8 + $0x20] sm:$0xff]
  %v44 = vld [vmem:[%s8 + $0x28] sm:$0xff]
  %v45 = vld [vmem:[%s8 + $0x30] sm:$0xff]
  %v46 = vld [vmem:[%s8 + $0x38] sm:$0xff]
  %vm47 = vcmask 523264
  %v49 = vsel %vm47, %v35, 0
  %v52 = vsel %vm47, %v36, 0
  %v55 = vsel %vm47, %v37, 0
  %v58 = vsel %vm47, %v38, 0
  %60 = vmatprep.subr.mxu0 0.0
  %61 = vmatpush1.msra.mxu0 0.0
  %62 = vmatprep.subr.mxu0 0.0
  %63 = vmatpush1.msra.mxu0 0.0
  %64 = vmatprep.subr.mxu0 0.0
  %65 = vmatpush1.msra.mxu0 0.0
  %66 = vmatprep.subr.mxu0 0.0
  %67 = vmatpush1.msra.mxu0 0.0
  %68 = vmatprep.subr.mxu0 0.0
  %69 = vmatpush1.msra.mxu0 0.0
  %70 = vmatprep.subr.mxu0 0.0
  %71 = vmatpush1.msra.mxu0 0.0
  %72 = vmatprep.subr.mxu0 0.0
  %73 = vmatpush1.msra.mxu0 0.0
  %74 = vmatprep.subr.mxu0 0.0
  %75 = vmatpush1.msra.mxu0 0.0
  %76 = vmatprep.subr.mxu0 0.0
  %77 = vmatpush1.msra.mxu0 %v46
  %78 = vmatprep.subr.mxu0 0.0
  %79 = vmatpush1.msra.mxu0 %v45
  %80 = vmatprep.subr.mxu0 0.0
  %81 = vmatpush1.msra.mxu0 %v44
  %82 = vmatprep.subr.mxu0 0.0
  %83 = vmatpush1.msra.mxu0 %v43
  %84 = vmatprep.subr.mxu0 0.0
  %85 = vmatpush1.msra.mxu0 %v42
  %86 = vmatprep.subr.mxu0 0.0
  %87 = vmatpush1.msra.mxu0 %v41
  %88 = vmatprep.subr.mxu0 0.0
  %89 = vmatpush1.msra.mxu0 %v40
  %90 = vmatprep.subr.mxu0 0.0
  %91 = vmatpush1.msra.mxu0 %v39
  %92 = vmatprep.subr.mxu0 0.0
  %93 = vmatpush2.msra.mxu0 0.0
  %94 = vmatprep.subr.mxu0 0.0
  %95 = vmatpush2.msra.mxu0 0.0
  %96 = vmatprep.subr.mxu0 0.0
  %97 = vmatpush2.msra.mxu0 0.0
  %98 = vmatprep.subr.mxu0 0.0
  %99 = vmatpush2.msra.mxu0 0.0
  %100 = vmatprep.subr.mxu0 0.0
  %101 = vmatpush2.msra.mxu0 0.0
  %102 = vmatprep.subr.mxu0 0.0
  %103 = vmatpush2.msra.mxu0 0.0
  %104 = vmatprep.subr.mxu0 0.0
  %105 = vmatpush2.msra.mxu0 0.0
  %106 = vmatprep.subr.mxu0 0.0
  %107 = vmatpush2.msra.mxu0 0.0
  %108 = vmatprep.subr.mxu0 0.0
  %109 = vmatpush2.msra.mxu0 0.0
  %110 = vmatprep.subr.mxu0 0.0
  %111 = vmatpush2.msra.mxu0 0.0
  %112 = vmatprep.subr.mxu0 0.0
  %113 = vmatpush2.msra.mxu0 0.0
  %114 = vmatprep.subr.mxu0 0.0
  %115 = vmatpush2.msra.mxu0 0.0
  %116 = vmatprep.subr.mxu0 0.0
  %117 = vmatpush2.msra.mxu0 0.0
  %118 = vmatprep.subr.mxu0 0.0
  %119 = vmatpush2.msra.mxu0 0.0
  %120 = vmatprep.subr.mxu0 0.0
  %121 = vmatpush2.msra.mxu0 0.0
  %122 = vmatprep.subr.mxu0 0.0
  %123 = vmatpush2.msra.mxu0 0.0
  %124 = vmatprep.mubr.f32.mxu0 0.0
  %125 = vmatmul.mubr.f32.gmra.mxu0 %v49
  %v126 = vpop.f32.mrf.mxu0
  %v127 = vadd.f32 0.0, %v126
  %v128 = vpop.f32.mrf.mxu0
  %129 = vmatprep.mubr.f32.mxu0 0.0
  %130 = vmatmul.mubr.f32.gmra.mxu0 %v52
  %v131 = vpop.f32.mrf.mxu0
  %v132 = vadd.f32 0.0, %v131
  %v133 = vpop.f32.mrf.mxu0
  %134 = vmatprep.mubr.f32.mxu0 0.0
  %135 = vmatmul.mubr.f32.gmra.mxu0 %v55
  %v136 = vpop.f32.mrf.mxu0
  %v137 = vadd.f32 0.0, %v136
  %v138 = vpop.f32.mrf.mxu0
  %139 = vmatprep.mubr.f32.mxu0 0.0
  %140 = vmatmul.mubr.f32.gmra.mxu0 %v58
  %v141 = vpop.f32.mrf.mxu0
  %v142 = vadd.f32 0.0, %v141
  %v143 = vpop.f32.mrf.mxu0
  %144 = vdwg.mxu0
  %v145 = vsel %vm47, %v127, 0.0
  %v146 = vsel %vm47, %v132, 0.0
  %v147 = vadd.f32 %v145, %v146
  %v148 = vsel %vm47, %v137, 0.0
  %v149 = vadd.f32 %v147, %v148
  %v150 = vsel %vm47, %v142, 0.0
  %v151 = vadd.f32 %v149, %v150
  %v152 = vrot.slane %v151, 4
  %v153 = vadd.f32 %v151, %v152
  %v154 = vrot.slane %v153, 2
  %v155 = vadd.f32 %v153, %v154
  %v156 = vrot.slane %v155, 1
  %v157 = vadd.f32 %v155, %v156
  %v158 = vmul.f32 %v157, 0.001953125
  %v159 = vsub.f32 %v35, %v158
  %v160 = vsub.f32 %v36, %v158
  %v161 = vsub.f32 %v37, %v158
  %v162 = vsub.f32 %v38, %v158
  %v163 = vmul.f32 %v159, %v159
  %v164 = vmul.f32 %v160, %v160
  %v165 = vmul.f32 %v161, %v161
  %v166 = vmul.f32 %v162, %v162
  %v168 = vsel %vm47, %v163, 0
  %v171 = vsel %vm47, %v164, 0
  %v174 = vsel %vm47, %v165, 0
  %v177 = vsel %vm47, %v166, 0
  %179 = vmatprep.subr.mxu0 0.0
  %180 = vmatpush1.msra.mxu0 0.0
  %181 = vmatprep.subr.mxu0 0.0
  %182 = vmatpush1.msra.mxu0 0.0
  %183 = vmatprep.subr.mxu0 0.0
  %184 = vmatpush1.msra.mxu0 0.0
  %185 = vmatprep.subr.mxu0 0.0
  %186 = vmatpush1.msra.mxu0 0.0
  %187 = vmatprep.subr.mxu0 0.0
  %188 = vmatpush1.msra.mxu0 0.0
  %189 = vmatprep.subr.mxu0 0.0
  %190 = vmatpush1.msra.mxu0 0.0
  %191 = vmatprep.subr.mxu0 0.0
  %192 = vmatpush1.msra.mxu0 0.0
  %193 = vmatprep.subr.mxu0 0.0
  %194 = vmatpush1.msra.mxu0 0.0
  %195 = vmatprep.subr.mxu0 0.0
  %196 = vmatpush1.msra.mxu0 %v46
  %197 = vmatprep.subr.mxu0 0.0
  %198 = vmatpush1.msra.mxu0 %v45
  %199 = vmatprep.subr.mxu0 0.0
  %200 = vmatpush1.msra.mxu0 %v44
  %201 = vmatprep.subr.mxu0 0.0
  %202 = vmatpush1.msra.mxu0 %v43
  %203 = vmatprep.subr.mxu0 0.0
  %204 = vmatpush1.msra.mxu0 %v42
  %205 = vmatprep.subr.mxu0 0.0
  %206 = vmatpush1.msra.mxu0 %v41
  %207 = vmatprep.subr.mxu0 0.0
  %208 = vmatpush1.msra.mxu0 %v40
  %209 = vmatprep.subr.mxu0 0.0
  %210 = vmatpush1.msra.mxu0 %v39
  %211 = vmatprep.subr.mxu0 0.0
  %212 = vmatpush2.msra.mxu0 0.0
  %213 = vmatprep.subr.mxu0 0.0
  %214 = vmatpush2.msra.mxu0 0.0
  %215 = vmatprep.subr.mxu0 0.0
  %216 = vmatpush2.msra.mxu0 0.0
  %217 = vmatprep.subr.mxu0 0.0
  %218 = vmatpush2.msra.mxu0 0.0
  %219 = vmatprep.subr.mxu0 0.0
  %220 = vmatpush2.msra.mxu0 0.0
  %221 = vmatprep.subr.mxu0 0.0
  %222 = vmatpush2.msra.mxu0 0.0
  %223 = vmatprep.subr.mxu0 0.0
  %224 = vmatpush2.msra.mxu0 0.0
  %225 = vmatprep.subr.mxu0 0.0
  %226 = vmatpush2.msra.mxu0 0.0
  %227 = vmatprep.subr.mxu0 0.0
  %228 = vmatpush2.msra.mxu0 0.0
  %229 = vmatprep.subr.mxu0 0.0
  %230 = vmatpush2.msra.mxu0 0.0
  %231 = vmatprep.subr.mxu0 0.0
  %232 = vmatpush2.msra.mxu0 0.0
  %233 = vmatprep.subr.mxu0 0.0
  %234 = vmatpush2.msra.mxu0 0.0
  %235 = vmatprep.subr.mxu0 0.0
  %236 = vmatpush2.msra.mxu0 0.0
  %237 = vmatprep.subr.mxu0 0.0
  %238 = vmatpush2.msra.mxu0 0.0
  %239 = vmatprep.subr.mxu0 0.0
  %240 = vmatpush2.msra.mxu0 0.0
  %241 = vmatprep.subr.mxu0 0.0
  %242 = vmatpush2.msra.mxu0 0.0
  %243 = vmatprep.mubr.f32.mxu0 0.0
  %244 = vmatmul.mubr.f32.gmra.mxu0 %v168
  %v245 = vpop.f32.mrf.mxu0
  %v246 = vadd.f32 0.0, %v245
  %v247 = vpop.f32.mrf.mxu0
  %248 = vmatprep.mubr.f32.mxu0 0.0
  %249 = vmatmul.mubr.f32.gmra.mxu0 %v171
  %v250 = vpop.f32.mrf.mxu0
  %v251 = vadd.f32 0.0, %v250
  %v252 = vpop.f32.mrf.mxu0
  %253 = vmatprep.mubr.f32.mxu0 0.0
  %254 = vmatmul.mubr.f32.gmra.mxu0 %v174
  %v255 = vpop.f32.mrf.mxu0
  %v256 = vadd.f32 0.0, %v255
  %v257 = vpop.f32.mrf.mxu0
  %258 = vmatprep.mubr.f32.mxu0 0.0
  %259 = vmatmul.mubr.f32.gmra.mxu0 %v177
  %v260 = vpop.f32.mrf.mxu0
  %v261 = vadd.f32 0.0, %v260
  %v262 = vpop.f32.mrf.mxu0
  %263 = vdwg.mxu0
  %v264 = vsel %vm47, %v246, 0.0
  %v265 = vsel %vm47, %v251, 0.0
  %v266 = vadd.f32 %v264, %v265
  %v267 = vsel %vm47, %v256, 0.0
  %v268 = vadd.f32 %v266, %v267
  %v269 = vsel %vm47, %v261, 0.0
  %v270 = vadd.f32 %v268, %v269
  %v271 = vrot.slane %v270, 4
  %v272 = vadd.f32 %v270, %v271
  %v273 = vrot.slane %v272, 2
  %v274 = vadd.f32 %v272, %v273
  %v275 = vrot.slane %v274, 1
  %v276 = vadd.f32 %v274, %v275
  %v277 = vmul.f32 %v276, 0.001953125
  %v278 = vld [vmem:[%s4] sm:$0x1]
  %v279 = vadd.f32 %v277, 1e-05
  %v280 = vrsqrt.pop %v279
  %v281 = vmul.f32 %v278, %v280
  %v282 = vld [vmem:[%s5] sm:$0x1]
  %v283 = vmul.f32 %v158, %v281
  %v284 = vsub.f32 %v282, %v283
  %v286 = vlaneseq
  %v287 = vshrl.u32 %v286, 7
  %v288 = vsub.s32 0, %v287
  %v289 = vrot.slane %v281, %v288
  %v291 = vmul.f32 %v35, %v289
  %v292 = vmul.f32 %v36, %v289
  %v293 = vmul.f32 %v37, %v289
  %v294 = vmul.f32 %v38, %v289
  %v296 = vlaneseq
  %v297 = vshrl.u32 %v296, 7
  %v298 = vsub.s32 0, %v297
  %v299 = vrot.slane %v284, %v298
  %v301 = vadd.f32 %v291, %v299
  %v302 = vadd.f32 %v292, %v299
  %v303 = vadd.f32 %v293, %v299
  %v304 = vadd.f32 %v294, %v299
  %v305 = vmax.f32 %v301, 0.0
  %v306 = vmax.f32 %v302, 0.0
  %v307 = vmax.f32 %v303, 0.0
  %v308 = vmax.f32 %v304, 0.0
  %309 = vst.msk [vmem:[#allocation2] sm:$0xff] %vm47, 0.0
  %310 = vst.msk [vmem:[#allocation2 + $0x8] sm:$0xff] %vm47, 0.0
  %311 = vst.msk [vmem:[#allocation2 + $0x10] sm:$0xff] %vm47, 0.0
  %312 = vst.msk [vmem:[#allocation2 + $0x18] sm:$0xff] %vm47, 0.0
  %vm313 = vcmask 519168
  %314 = vst.msk [vmem:[#allocation2 + $0x20] sm:$0xf] %vm313, 0.0
  %315 = vst.msk [vmem:[#allocation2 + $0x1] sm:$0xff] %vm47, %v305
  %316 = vst.msk [vmem:[#allocation2 + $0x9] sm:$0xff] %vm47, %v306
  %317 = vst.msk [vmem:[#allocation2 + $0x13] sm:$0xff] %vm47, %v307
  %318 = vst.msk [vmem:[#allocation2 + $0x1b] sm:$0xff] %vm47, %v308
  %v319 = vld [vmem:[#allocation2] sm:$0xff]
  %v320 = vld [vmem:[#allocation2 + $0x8] sm:$0xff]
  %v321 = vld [vmem:[#allocation2 + $0x10] sm:$0xff]
  %v322 = vld [vmem:[#allocation2 + $0x18] sm:$0xff]
  %v323 = vld [vmem:[#allocation2 + $0x20] sm:$0x3]
  %v324 = vld [vmem:[%s2] sm:$0xff]
  %v325 = vld [vmem:[%s2 + $0x8] sm:$0xff]
  %v326 = vld [vmem:[%s2 + $0x10] sm:$0xff]
  %v327 = vld [vmem:[%s2 + $0x18] sm:$0xff]
  %v328 = vld [vmem:[%s2 + $0x20] sm:$0xff]
  %v329 = vld [vmem:[%s2 + $0x28] sm:$0xff]
  %v330 = vld [vmem:[%s2 + $0x30] sm:$0xff]
  %v331 = vld [vmem:[%s2 + $0x38] sm:$0xff]
  %v332 = vld [vmem:[#allocation2 + $0x1] sm:$0xff]
  %v333 = vld [vmem:[#allocation2 + $0x9] sm:$0xff]
  %v334 = vld [vmem:[#allocation2 + $0x11] sm:$0xff]
  %v335 = vld [vmem:[#allocation2 + $0x19] sm:$0xff]
  %v336 = vld [vmem:[#allocation2 + $0x21] sm:$0x3]
  %s337 = scalar_lea.vmem %s2, 64
  %v338 = vld [vmem:[%s337] sm:$0xff]
  %v339 = vld [vmem:[%s337 + $0x8] sm:$0xff]
  %v340 = vld [vmem:[%s337 + $0x10] sm:$0xff]
  %v341 = vld [vmem:[%s337 + $0x18] sm:$0xff]
  %v342 = vld [vmem:[%s337 + $0x20] sm:$0xff]
  %v343 = vld [vmem:[%s337 + $0x28] sm:$0xff]
  %v344 = vld [vmem:[%s337 + $0x30] sm:$0xff]
  %v345 = vld [vmem:[%s337 + $0x38] sm:$0xff]
  %v347 = vsel %vm47, %v332, 0
  %v350 = vsel %vm47, %v333, 0
  %v353 = vsel %vm47, %v334, 0
  %v356 = vsel %vm47, %v335, 0
  %v359 = vsel %vm47, %v336, 0
  %361 = vmatprep.subr.mxu0 0.0
  %362 = vmatpush1.msra.mxu0 0.0
  %363 = vmatprep.subr.mxu0 0.0
  %364 = vmatpush1.msra.mxu0 0.0
  %365 = vmatprep.subr.mxu0 0.0
  %366 = vmatpush1.msra.mxu0 0.0
  %367 = vmatprep.subr.mxu0 0.0
  %368 = vmatpush1.msra.mxu0 0.0
  %369 = vmatprep.subr.mxu0 0.0
  %370 = vmatpush1.msra.mxu0 0.0
  %371 = vmatprep.subr.mxu0 0.0
  %372 = vmatpush1.msra.mxu0 0.0
  %373 = vmatprep.subr.mxu0 0.0
  %374 = vmatpush1.msra.mxu0 0.0
  %375 = vmatprep.subr.mxu0 0.0
  %376 = vmatpush1.msra.mxu0 0.0
  %377 = vmatprep.subr.mxu0 0.0
  %378 = vmatpush1.msra.mxu0 %v345
  %379 = vmatprep.subr.mxu0 0.0
  %380 = vmatpush1.msra.mxu0 %v344
  %381 = vmatprep.subr.mxu0 0.0
  %382 = vmatpush1.msra.mxu0 %v343
  %383 = vmatprep.subr.mxu0 0.0
  %384 = vmatpush1.msra.mxu0 %v342
  %385 = vmatprep.subr.mxu0 0.0
  %386 = vmatpush1.msra.mxu0 %v341
  %387 = vmatprep.subr.mxu0 0.0
  %388 = vmatpush1.msra.mxu0 %v340
  %389 = vmatprep.subr.mxu0 0.0
  %390 = vmatpush1.msra.mxu0 %v339
  %391 = vmatprep.subr.mxu0 0.0
  %392 = vmatpush1.msra.mxu0 %v338
  %393 = vmatprep.subr.mxu0 0.0
  %394 = vmatpush2.msra.mxu0 0.0
  %395 = vmatprep.subr.mxu0 0.0
  %396 = vmatpush2.msra.mxu0 0.0
  %397 = vmatprep.subr.mxu0 0.0
  %398 = vmatpush2.msra.mxu0 0.0
  %399 = vmatprep.subr.mxu0 0.0
  %400 = vmatpush2.msra.mxu0 0.0
  %401 = vmatprep.subr.mxu0 0.0
  %402 = vmatpush2.msra.mxu0 0.0
  %403 = vmatprep.subr.mxu0 0.0
  %404 = vmatpush2.msra.mxu0 0.0
  %405 = vmatprep.subr.mxu0 0.0
  %406 = vmatpush2.msra.mxu0 0.0
  %407 = vmatprep.subr.mxu0 0.0
  %408 = vmatpush2.msra.mxu0 0.0
  %409 = vmatprep.subr.mxu0 0.0
  %410 = vmatpush2.msra.mxu0 0.0
  %411 = vmatprep.subr.mxu0 0.0
  %412 = vmatpush2.msra.mxu0 0.0
  %413 = vmatprep.subr.mxu0 0.0
  %414 = vmatpush2.msra.mxu0 0.0
  %415 = vmatprep.subr.mxu0 0.0
  %416 = vmatpush2.msra.mxu0 0.0
  %417 = vmatprep.subr.mxu0 0.0
  %418 = vmatpush2.msra.mxu0 0.0
  %419 = vmatprep.subr.mxu0 0.0
  %420 = vmatpush2.msra.mxu0 0.0
  %421 = vmatprep.subr.mxu0 0.0
  %422 = vmatpush2.msra.mxu0 0.0
  %423 = vmatprep.subr.mxu0 0.0
  %424 = vmatpush2.msra.mxu0 0.0
  %425 = vmatprep.mubr.f32.mxu0 0.0
  %426 = vmatmul.mubr.f32.gmra.mxu0 %v347
  %v427 = vpop.f32.mrf.mxu0
  %v428 = vadd.f32 0.0, %v427
  %v429 = vpop.f32.mrf.mxu0
  %430 = vmatprep.mubr.f32.mxu0 0.0
  %431 = vmatmul.mubr.f32.gmra.mxu0 %v350
  %v432 = vpop.f32.mrf.mxu0
  %v433 = vadd.f32 0.0, %v432
  %v434 = vpop.f32.mrf.mxu0
  %435 = vmatprep.mubr.f32.mxu0 0.0
  %436 = vmatmul.mubr.f32.gmra.mxu0 %v353
  %v437 = vpop.f32.mrf.mxu0
  %v438 = vadd.f32 0.0, %v437
  %v439 = vpop.f32.mrf.mxu0
  %440 = vmatprep.mubr.f32.mxu0 0.0
  %441 = vmatmul.mubr.f32.gmra.mxu0 %v356
  %v442 = vpop.f32.mrf.mxu0
  %v443 = vadd.f32 0.0, %v442
  %v444 = vpop.f32.mrf.mxu0
  %445 = vmatprep.mubr.f32.mxu0 0.0
  %446 = vmatmul.mubr.f32.gmra.mxu0 %v359
  %v447 = vpop.f32.mrf.mxu0
  %v448 = vadd.f32 0.0, %v447
  %v449 = vpop.f32.mrf.mxu0
  %450 = vdwg.mxu0
  %v452 = vsel %vm47, %v319, 0
  %v455 = vsel %vm47, %v320, 0
  %v458 = vsel %vm47, %v321, 0
  %v461 = vsel %vm47, %v322, 0
  %v464 = vsel %vm47, %v323, 0
  %466 = vmatprep.subr.mxu0 0.0
  %467 = vmatpush1.msra.mxu0 0.0
  %468 = vmatprep.subr.mxu0 0.0
  %469 = vmatpush1.msra.mxu0 0.0
  %470 = vmatprep.subr.mxu0 0.0
  %471 = vmatpush1.msra.mxu0 0.0
  %472 = vmatprep.subr.mxu0 0.0
  %473 = vmatpush1.msra.mxu0 0.0
  %474 = vmatprep.subr.mxu0 0.0
  %475 = vmatpush1.msra.mxu0 0.0
  %476 = vmatprep.subr.mxu0 0.0
  %477 = vmatpush1.msra.mxu0 0.0
  %478 = vmatprep.subr.mxu0 0.0
  %479 = vmatpush1.msra.mxu0 0.0
  %480 = vmatprep.subr.mxu0 0.0
  %481 = vmatpush1.msra.mxu0 0.0
  %482 = vmatprep.subr.mxu0 0.0
  %483 = vmatpush1.msra.mxu0 %v331
  %484 = vmatprep.subr.mxu0 0.0
  %485 = vmatpush1.msra.mxu0 %v330
  %486 = vmatprep.subr.mxu0 0.0
  %487 = vmatpush1.msra.mxu0 %v329
  %488 = vmatprep.subr.mxu0 0.0
  %489 = vmatpush1.msra.mxu0 %v328
  %490 = vmatprep.subr.mxu0 0.0
  %491 = vmatpush1.msra.mxu0 %v327
  %492 = vmatprep.subr.mxu0 0.0
  %493 = vmatpush1.msra.mxu0 %v326
  %494 = vmatprep.subr.mxu0 0.0
  %495 = vmatpush1.msra.mxu0 %v325
  %496 = vmatprep.subr.mxu0 0.0
  %497 = vmatpush1.msra.mxu0 %v324
  %498 = vmatprep.subr.mxu0 0.0
  %499 = vmatpush2.msra.mxu0 0.0
  %500 = vmatprep.subr.mxu0 0.0
  %501 = vmatpush2.msra.mxu0 0.0
  %502 = vmatprep.subr.mxu0 0.0
  %503 = vmatpush2.msra.mxu0 0.0
  %504 = vmatprep.subr.mxu0 0.0
  %505 = vmatpush2.msra.mxu0 0.0
  %506 = vmatprep.subr.mxu0 0.0
  %507 = vmatpush2.msra.mxu0 0.0
  %508 = vmatprep.subr.mxu0 0.0
  %509 = vmatpush2.msra.mxu0 0.0
  %510 = vmatprep.subr.mxu0 0.0
  %511 = vmatpush2.msra.mxu0 0.0
  %512 = vmatprep.subr.mxu0 0.0
  %513 = vmatpush2.msra.mxu0 0.0
  %514 = vmatprep.subr.mxu0 0.0
  %515 = vmatpush2.msra.mxu0 0.0
  %516 = vmatprep.subr.mxu0 0.0
  %517 = vmatpush2.msra.mxu0 0.0
  %518 = vmatprep.subr.mxu0 0.0
  %519 = vmatpush2.msra.mxu0 0.0
  %520 = vmatprep.subr.mxu0 0.0
  %521 = vmatpush2.msra.mxu0 0.0
  %522 = vmatprep.subr.mxu0 0.0
  %523 = vmatpush2.msra.mxu0 0.0
  %524 = vmatprep.subr.mxu0 0.0
  %525 = vmatpush2.msra.mxu0 0.0
  %526 = vmatprep.subr.mxu0 0.0
  %527 = vmatpush2.msra.mxu0 0.0
  %528 = vmatprep.subr.mxu0 0.0
  %529 = vmatpush2.msra.mxu0 0.0
  %530 = vmatprep.mubr.f32.mxu0 0.0
  %531 = vmatmul.mubr.f32.gmra.mxu0 %v452
  %v532 = vpop.f32.mrf.mxu0
  %v533 = vadd.f32 %v428, %v532
  %v534 = vpop.f32.mrf.mxu0
  %535 = vmatprep.mubr.f32.mxu0 0.0
  %536 = vmatmul.mubr.f32.gmra.mxu0 %v455
  %v537 = vpop.f32.mrf.mxu0
  %v538 = vadd.f32 %v433, %v537
  %v539 = vpop.f32.mrf.mxu0
  %540 = vmatprep.mubr.f32.mxu0 0.0
  %541 = vmatmul.mubr.f32.gmra.mxu0 %v458
  %v542 = vpop.f32.mrf.mxu0
  %v543 = vadd.f32 %v438, %v542
  %v544 = vpop.f32.mrf.mxu0
  %545 = vmatprep.mubr.f32.mxu0 0.0
  %546 = vmatmul.mubr.f32.gmra.mxu0 %v461
  %v547 = vpop.f32.mrf.mxu0
  %v548 = vadd.f32 %v443, %v547
  %v549 = vpop.f32.mrf.mxu0
  %550 = vmatprep.mubr.f32.mxu0 0.0
  %551 = vmatmul.mubr.f32.gmra.mxu0 %v464
  %v552 = vpop.f32.mrf.mxu0
  %v553 = vadd.f32 %v448, %v552
  %v554 = vpop.f32.mrf.mxu0
  %555 = vdwg.mxu0
  %v556 = vld [vmem:[#allocation2 + $0x2] sm:$0xff]
  %v557 = vld [vmem:[#allocation2 + $0xa] sm:$0xff]
  %v558 = vld [vmem:[#allocation2 + $0x12] sm:$0xff]
  %v559 = vld [vmem:[#allocation2 + $0x1a] sm:$0xff]
  %v560 = vld [vmem:[#allocation2 + $0x22] sm:$0x3]
  %s561 = scalar_lea.vmem %s2, 128
  %v562 = vld [vmem:[%s561] sm:$0xff]
  %v563 = vld [vmem:[%s561 + $0x8] sm:$0xff]
  %v564 = vld [vmem:[%s561 + $0x10] sm:$0xff]
  %v565 = vld [vmem:[%s561 + $0x18] sm:$0xff]
  %v566 = vld [vmem:[%s561 + $0x20] sm:$0xff]
  %v567 = vld [vmem:[%s561 + $0x28] sm:$0xff]
  %v568 = vld [vmem:[%s561 + $0x30] sm:$0xff]
  %v569 = vld [vmem:[%s561 + $0x38] sm:$0xff]
  %v571 = vsel %vm47, %v556, 0
  %v574 = vsel %vm47, %v557, 0
  %v577 = vsel %vm47, %v558, 0
  %v580 = vsel %vm47, %v559, 0
  %v583 = vsel %vm47, %v560, 0
  %585 = vmatprep.subr.mxu0 0.0
  %586 = vmatpush1.msra.mxu0 0.0
  %587 = vmatprep.subr.mxu0 0.0
  %588 = vmatpush1.msra.mxu0 0.0
  %589 = vmatprep.subr.mxu0 0.0
  %590 = vmatpush1.msra.mxu0 0.0
  %591 = vmatprep.subr.mxu0 0.0
  %592 = vmatpush1.msra.mxu0 0.0
  %593 = vmatprep.subr.mxu0 0.0
  %594 = vmatpush1.msra.mxu0 0.0
  %595 = vmatprep.subr.mxu0 0.0
  %596 = vmatpush1.msra.mxu0 0.0
  %597 = vmatprep.subr.mxu0 0.0
  %598 = vmatpush1.msra.mxu0 0.0
  %599 = vmatprep.subr.mxu0 0.0
  %600 = vmatpush1.msra.mxu0 0.0
  %601 = vmatprep.subr.mxu0 0.0
  %602 = vmatpush1.msra.mxu0 %v569
  %603 = vmatprep.subr.mxu0 0.0
  %604 = vmatpush1.msra.mxu0 %v568
  %605 = vmatprep.subr.mxu0 0.0
  %606 = vmatpush1.msra.mxu0 %v567
  %607 = vmatprep.subr.mxu0 0.0
  %608 = vmatpush1.msra.mxu0 %v566
  %609 = vmatprep.subr.mxu0 0.0
  %610 = vmatpush1.msra.mxu0 %v565
  %611 = vmatprep.subr.mxu0 0.0
  %612 = vmatpush1.msra.mxu0 %v564
  %613 = vmatprep.subr.mxu0 0.0
  %614 = vmatpush1.msra.mxu0 %v563
  %615 = vmatprep.subr.mxu0 0.0
  %616 = vmatpush1.msra.mxu0 %v562
  %617 = vmatprep.subr.mxu0 0.0
  %618 = vmatpush2.msra.mxu0 0.0
  %619 = vmatprep.subr.mxu0 0.0
  %620 = vmatpush2.msra.mxu0 0.0
  %621 = vmatprep.subr.mxu0 0.0
  %622 = vmatpush2.msra.mxu0 0.0
  %623 = vmatprep.subr.mxu0 0.0
  %624 = vmatpush2.msra.mxu0 0.0
  %625 = vmatprep.subr.mxu0 0.0
  %626 = vmatpush2.msra.mxu0 0.0
  %627 = vmatprep.subr.mxu0 0.0
  %628 = vmatpush2.msra.mxu0 0.0
  %629 = vmatprep.subr.mxu0 0.0
  %630 = vmatpush2.msra.mxu0 0.0
  %631 = vmatprep.subr.mxu0 0.0
  %632 = vmatpush2.msra.mxu0 0.0
  %633 = vmatprep.subr.mxu0 0.0
  %634 = vmatpush2.msra.mxu0 0.0
  %635 = vmatprep.subr.mxu0 0.0
  %636 = vmatpush2.msra.mxu0 0.0
  %637 = vmatprep.subr.mxu0 0.0
  %638 = vmatpush2.msra.mxu0 0.0
  %639 = vmatprep.subr.mxu0 0.0
  %640 = vmatpush2.msra.mxu0 0.0
  %641 = vmatprep.subr.mxu0 0.0
  %642 = vmatpush2.msra.mxu0 0.0
  %643 = vmatprep.subr.mxu0 0.0
  %644 = vmatpush2.msra.mxu0 0.0
  %645 = vmatprep.subr.mxu0 0.0
  %646 = vmatpush2.msra.mxu0 0.0
  %647 = vmatprep.subr.mxu0 0.0
  %648 = vmatpush2.msra.mxu0 0.0
  %649 = vmatprep.mubr.f32.mxu0 0.0
  %650 = vmatmul.mubr.f32.gmra.mxu0 %v571
  %v651 = vpop.f32.mrf.mxu0
  %v652 = vadd.f32 0.0, %v651
  %v653 = vpop.f32.mrf.mxu0
  %654 = vmatprep.mubr.f32.mxu0 0.0
  %655 = vmatmul.mubr.f32.gmra.mxu0 %v574
  %v656 = vpop.f32.mrf.mxu0
  %v657 = vadd.f32 0.0, %v656
  %v658 = vpop.f32.mrf.mxu0
  %659 = vmatprep.mubr.f32.mxu0 0.0
  %660 = vmatmul.mubr.f32.gmra.mxu0 %v577
  %v661 = vpop.f32.mrf.mxu0
  %v662 = vadd.f32 0.0, %v661
  %v663 = vpop.f32.mrf.mxu0
  %664 = vmatprep.mubr.f32.mxu0 0.0
  %665 = vmatmul.mubr.f32.gmra.mxu0 %v580
  %v666 = vpop.f32.mrf.mxu0
  %v667 = vadd.f32 0.0, %v666
  %v668 = vpop.f32.mrf.mxu0
  %669 = vmatprep.mubr.f32.mxu0 0.0
  %670 = vmatmul.mubr.f32.gmra.mxu0 %v583
  %v671 = vpop.f32.mrf.mxu0
  %v672 = vadd.f32 0.0, %v671
  %v673 = vpop.f32.mrf.mxu0
  %674 = vdwg.mxu0
  %v675 = vadd.f32 %v533, %v652
  %v676 = vadd.f32 %v538, %v657
  %v677 = vadd.f32 %v543, %v662
  %v678 = vadd.f32 %v548, %v667
  %v679 = vadd.f32 %v553, %v672
  %v680 = vld [vmem:[%s9] sm:$0xff]
  %v681 = vld [vmem:[%s9 + $0x8] sm:$0xff]
  %v682 = vld [vmem:[%s9 + $0x10] sm:$0xff]
  %v683 = vld [vmem:[%s9 + $0x18] sm:$0xff]
  %v684 = vld [vmem:[%s9 + $0x20] sm:$0xff]
  %v685 = vld [vmem:[%s9 + $0x28] sm:$0xff]
  %v686 = vld [vmem:[%s9 + $0x30] sm:$0xff]
  %v687 = vld [vmem:[%s9 + $0x38] sm:$0xff]
  %v688 = vld [vmem:[%s9 + $0x40] sm:$0xff]
  %v689 = vld [vmem:[%s9 + $0x48] sm:$0xff]
  %v690 = vld [vmem:[%s9 + $0x50] sm:$0xff]
  %v691 = vld [vmem:[%s9 + $0x58] sm:$0xff]
  %v692 = vld [vmem:[%s9 + $0x60] sm:$0xff]
  %v693 = vld [vmem:[%s9 + $0x68] sm:$0xff]
  %v694 = vld [vmem:[%s9 + $0x70] sm:$0xff]
  %v695 = vld [vmem:[%s9 + $0x78] sm:$0xff]
  %696 = vmatprep.subr.mxu0 0.0
  %697 = vmatpush1.msra.mxu0 %v695
  %698 = vmatprep.subr.mxu0 0.0
  %699 = vmatpush1.msra.mxu0 %v694
  %700 = vmatprep.subr.mxu0 0.0
  %701 = vmatpush1.msra.mxu0 %v693
  %702 = vmatprep.subr.mxu0 0.0
  %703 = vmatpush1.msra.mxu0 %v692
  %704 = vmatprep.subr.mxu0 0.0
  %705 = vmatpush1.msra.mxu0 %v691
  %706 = vmatprep.subr.mxu0 0.0
  %707 = vmatpush1.msra.mxu0 %v690
  %708 = vmatprep.subr.mxu0 0.0
  %709 = vmatpush1.msra.mxu0 %v689
  %710 = vmatprep.subr.mxu0 0.0
  %711 = vmatpush1.msra.mxu0 %v688
  %712 = vmatprep.subr.mxu0 0.0
  %713 = vmatpush1.msra.mxu0 %v687
  %714 = vmatprep.subr.mxu0 0.0
  %715 = vmatpush1.msra.mxu0 %v686
  %716 = vmatprep.subr.mxu0 0.0
  %717 = vmatpush1.msra.mxu0 %v685
  %718 = vmatprep.subr.mxu0 0.0
  %719 = vmatpush1.msra.mxu0 %v684
  %720 = vmatprep.subr.mxu0 0.0
  %721 = vmatpush1.msra.mxu0 %v683
  %722 = vmatprep.subr.mxu0 0.0
  %723 = vmatpush1.msra.mxu0 %v682
  %724 = vmatprep.subr.mxu0 0.0
  %725 = vmatpush1.msra.mxu0 %v681
  %726 = vmatprep.subr.mxu0 0.0
  %727 = vmatpush1.msra.mxu0 %v680
  %728 = vmatprep.subr.mxu0 0.0
  %729 = vmatpush2.msra.mxu0 0.0
  %730 = vmatprep.subr.mxu0 0.0
  %731 = vmatpush2.msra.mxu0 0.0
  %732 = vmatprep.subr.mxu0 0.0
  %733 = vmatpush2.msra.mxu0 0.0
  %734 = vmatprep.subr.mxu0 0.0
  %735 = vmatpush2.msra.mxu0 0.0
  %736 = vmatprep.subr.mxu0 0.0
  %737 = vmatpush2.msra.mxu0 0.0
  %738 = vmatprep.subr.mxu0 0.0
  %739 = vmatpush2.msra.mxu0 0.0
  %740 = vmatprep.subr.mxu0 0.0
  %741 = vmatpush2.msra.mxu0 0.0
  %742 = vmatprep.subr.mxu0 0.0
  %743 = vmatpush2.msra.mxu0 0.0
  %744 = vmatprep.subr.mxu0 0.0
  %745 = vmatpush2.msra.mxu0 0.0
  %746 = vmatprep.subr.mxu0 0.0
  %747 = vmatpush2.msra.mxu0 0.0
  %748 = vmatprep.subr.mxu0 0.0
  %749 = vmatpush2.msra.mxu0 0.0
  %750 = vmatprep.subr.mxu0 0.0
  %751 = vmatpush2.msra.mxu0 0.0
  %752 = vmatprep.subr.mxu0 0.0
  %753 = vmatpush2.msra.mxu0 0.0
  %754 = vmatprep.subr.mxu0 0.0
  %755 = vmatpush2.msra.mxu0 0.0
  %756 = vmatprep.subr.mxu0 0.0
  %757 = vmatpush2.msra.mxu0 0.0
  %758 = vmatprep.subr.mxu0 0.0
  %759 = vmatpush2.msra.mxu0 0.0
  %760 = vmatprep.mubr.f32.mxu0 0.0
  %761 = vmatmul.mubr.f32.gmra.mxu0 %v675
  %v762 = vpop.f32.mrf.mxu0
  %v763 = vadd.f32 0.0, %v762
  %v764 = vpop.f32.mrf.mxu0
  %765 = vmatprep.mubr.f32.mxu0 0.0
  %766 = vmatmul.mubr.f32.gmra.mxu0 %v676
  %v767 = vpop.f32.mrf.mxu0
  %v768 = vadd.f32 0.0, %v767
  %v769 = vpop.f32.mrf.mxu0
  %770 = vdwg.mxu0
  %v771 = vadd.f32 %v763, %v768
  %v772 = vrot.slane %v771, 4
  %v773 = vadd.f32 %v771, %v772
  %v774 = vrot.slane %v773, 2
  %v775 = vadd.f32 %v773, %v774
  %v776 = vrot.slane %v775, 1
  %v777 = vadd.f32 %v775, %v776
  %v778 = vadd.f32 %v777, 0.0
  %vm782 = vcmask 1045504
  %v783 = vrot.slane %v677, 2
  %v784 = vrot.slane %v678, 2
  %v785 = vsel %vm782, %v783, %v784
  %v786 = vrot.slane %v679, 2
  %v787 = vsel %vm782, %v784, %v786
  %790 = vmatprep.subr.mxu0 0.0
  %791 = vmatpush1.msra.mxu0 %v695
  %792 = vmatprep.subr.mxu0 0.0
  %793 = vmatpush1.msra.mxu0 %v694
  %794 = vmatprep.subr.mxu0 0.0
  %795 = vmatpush1.msra.mxu0 %v693
  %796 = vmatprep.subr.mxu0 0.0
  %797 = vmatpush1.msra.mxu0 %v692
  %798 = vmatprep.subr.mxu0 0.0
  %799 = vmatpush1.msra.mxu0 %v691
  %800 = vmatprep.subr.mxu0 0.0
  %801 = vmatpush1.msra.mxu0 %v690
  %802 = vmatprep.subr.mxu0 0.0
  %803 = vmatpush1.msra.mxu0 %v689
  %804 = vmatprep.subr.mxu0 0.0
  %805 = vmatpush1.msra.mxu0 %v688
  %806 = vmatprep.subr.mxu0 0.0
  %807 = vmatpush1.msra.mxu0 %v687
  %808 = vmatprep.subr.mxu0 0.0
  %809 = vmatpush1.msra.mxu0 %v686
  %810 = vmatprep.subr.mxu0 0.0
  %811 = vmatpush1.msra.mxu0 %v685
  %812 = vmatprep.subr.mxu0 0.0
  %813 = vmatpush1.msra.mxu0 %v684
  %814 = vmatprep.subr.mxu0 0.0
  %815 = vmatpush1.msra.mxu0 %v683
  %816 = vmatprep.subr.mxu0 0.0
  %817 = vmatpush1.msra.mxu0 %v682
  %818 = vmatprep.subr.mxu0 0.0
  %819 = vmatpush1.msra.mxu0 %v681
  %820 = vmatprep.subr.mxu0 0.0
  %821 = vmatpush1.msra.mxu0 %v680
  %822 = vmatprep.subr.mxu0 0.0
  %823 = vmatpush2.msra.mxu0 0.0
  %824 = vmatprep.subr.mxu0 0.0
  %825 = vmatpush2.msra.mxu0 0.0
  %826 = vmatprep.subr.mxu0 0.0
  %827 = vmatpush2.msra.mxu0 0.0
  %828 = vmatprep.subr.mxu0 0.0
  %829 = vmatpush2.msra.mxu0 0.0
  %830 = vmatprep.subr.mxu0 0.0
  %831 = vmatpush2.msra.mxu0 0.0
  %832 = vmatprep.subr.mxu0 0.0
  %833 = vmatpush2.msra.mxu0 0.0
  %834 = vmatprep.subr.mxu0 0.0
  %835 = vmatpush2.msra.mxu0 0.0
  %836 = vmatprep.subr.mxu0 0.0
  %837 = vmatpush2.msra.mxu0 0.0
  %838 = vmatprep.subr.mxu0 0.0
  %839 = vmatpush2.msra.mxu0 0.0
  %840 = vmatprep.subr.mxu0 0.0
  %841 = vmatpush2.msra.mxu0 0.0
  %842 = vmatprep.subr.mxu0 0.0
  %843 = vmatpush2.msra.mxu0 0.0
  %844 = vmatprep.subr.mxu0 0.0
  %845 = vmatpush2.msra.mxu0 0.0
  %846 = vmatprep.subr.mxu0 0.0
  %847 = vmatpush2.msra.mxu0 0.0
  %848 = vmatprep.subr.mxu0 0.0
  %849 = vmatpush2.msra.mxu0 0.0
  %850 = vmatprep.subr.mxu0 0.0
  %851 = vmatpush2.msra.mxu0 0.0
  %852 = vmatprep.subr.mxu0 0.0
  %853 = vmatpush2.msra.mxu0 0.0
  %854 = vmatprep.mubr.f32.mxu0 0.0
  %855 = vmatmul.mubr.f32.gmra.mxu0 %v785
  %v856 = vpop.f32.mrf.mxu0
  %v857 = vadd.f32 0.0, %v856
  %v858 = vpop.f32.mrf.mxu0
  %859 = vmatprep.mubr.f32.mxu0 0.0
  %860 = vmatmul.mubr.f32.gmra.mxu0 %v787
  %v861 = vpop.f32.mrf.mxu0
  %v862 = vadd.f32 0.0, %v861
  %v863 = vpop.f32.mrf.mxu0
  %864 = vdwg.mxu0
  %v865 = vadd.f32 %v857, %v862
  %v866 = vrot.slane %v865, 4
  %v867 = vadd.f32 %v865, %v866
  %v868 = vrot.slane %v867, 2
  %v869 = vadd.f32 %v867, %v868
  %v870 = vrot.slane %v869, 1
  %v871 = vadd.f32 %v869, %v870
  %v872 = vadd.f32 %v778, %v871
  %v873 = vmul.f32 %v872, 0.001953125
  %v874 = vsub.f32 %v675, %v873
  %v875 = vsub.f32 %v676, %v873
  %v876 = vmul.f32 %v874, %v874
  %v877 = vmul.f32 %v875, %v875
  %878 = vmatprep.subr.mxu0 0.0
  %879 = vmatpush1.msra.mxu0 %v695
  %880 = vmatprep.subr.mxu0 0.0
  %881 = vmatpush1.msra.mxu0 %v694
  %882 = vmatprep.subr.mxu0 0.0
  %883 = vmatpush1.msra.mxu0 %v693
  %884 = vmatprep.subr.mxu0 0.0
  %885 = vmatpush1.msra.mxu0 %v692
  %886 = vmatprep.subr.mxu0 0.0
  %887 = vmatpush1.msra.mxu0 %v691
  %888 = vmatprep.subr.mxu0 0.0
  %889 = vmatpush1.msra.mxu0 %v690
  %890 = vmatprep.subr.mxu0 0.0
  %891 = vmatpush1.msra.mxu0 %v689
  %892 = vmatprep.subr.mxu0 0.0
  %893 = vmatpush1.msra.mxu0 %v688
  %894 = vmatprep.subr.mxu0 0.0
  %895 = vmatpush1.msra.mxu0 %v687
  %896 = vmatprep.subr.mxu0 0.0
  %897 = vmatpush1.msra.mxu0 %v686
  %898 = vmatprep.subr.mxu0 0.0
  %899 = vmatpush1.msra.mxu0 %v685
  %900 = vmatprep.subr.mxu0 0.0
  %901 = vmatpush1.msra.mxu0 %v684
  %902 = vmatprep.subr.mxu0 0.0
  %903 = vmatpush1.msra.mxu0 %v683
  %904 = vmatprep.subr.mxu0 0.0
  %905 = vmatpush1.msra.mxu0 %v682
  %906 = vmatprep.subr.mxu0 0.0
  %907 = vmatpush1.msra.mxu0 %v681
  %908 = vmatprep.subr.mxu0 0.0
  %909 = vmatpush1.msra.mxu0 %v680
  %910 = vmatprep.subr.mxu0 0.0
  %911 = vmatpush2.msra.mxu0 0.0
  %912 = vmatprep.subr.mxu0 0.0
  %913 = vmatpush2.msra.mxu0 0.0
  %914 = vmatprep.subr.mxu0 0.0
  %915 = vmatpush2.msra.mxu0 0.0
  %916 = vmatprep.subr.mxu0 0.0
  %917 = vmatpush2.msra.mxu0 0.0
  %918 = vmatprep.subr.mxu0 0.0
  %919 = vmatpush2.msra.mxu0 0.0
  %920 = vmatprep.subr.mxu0 0.0
  %921 = vmatpush2.msra.mxu0 0.0
  %922 = vmatprep.subr.mxu0 0.0
  %923 = vmatpush2.msra.mxu0 0.0
  %924 = vmatprep.subr.mxu0 0.0
  %925 = vmatpush2.msra.mxu0 0.0
  %926 = vmatprep.subr.mxu0 0.0
  %927 = vmatpush2.msra.mxu0 0.0
  %928 = vmatprep.subr.mxu0 0.0
  %929 = vmatpush2.msra.mxu0 0.0
  %930 = vmatprep.subr.mxu0 0.0
  %931 = vmatpush2.msra.mxu0 0.0
  %932 = vmatprep.subr.mxu0 0.0
  %933 = vmatpush2.msra.mxu0 0.0
  %934 = vmatprep.subr.mxu0 0.0
  %935 = vmatpush2.msra.mxu0 0.0
  %936 = vmatprep.subr.mxu0 0.0
  %937 = vmatpush2.msra.mxu0 0.0
  %938 = vmatprep.subr.mxu0 0.0
  %939 = vmatpush2.msra.mxu0 0.0
  %940 = vmatprep.subr.mxu0 0.0
  %941 = vmatpush2.msra.mxu0 0.0
  %942 = vmatprep.mubr.f32.mxu0 0.0
  %943 = vmatmul.mubr.f32.gmra.mxu0 %v876
  %v944 = vpop.f32.mrf.mxu0
  %v945 = vadd.f32 0.0, %v944
  %v946 = vpop.f32.mrf.mxu0
  %947 = vmatprep.mubr.f32.mxu0 0.0
  %948 = vmatmul.mubr.f32.gmra.mxu0 %v877
  %v949 = vpop.f32.mrf.mxu0
  %v950 = vadd.f32 0.0, %v949
  %v951 = vpop.f32.mrf.mxu0
  %952 = vdwg.mxu0
  %v953 = vadd.f32 %v945, %v950
  %v954 = vrot.slane %v953, 4
  %v955 = vadd.f32 %v953, %v954
  %v956 = vrot.slane %v955, 2
  %v957 = vadd.f32 %v955, %v956
  %v958 = vrot.slane %v957, 1
  %v959 = vadd.f32 %v957, %v958
  %v960 = vadd.f32 %v959, 0.0
  %v961 = vsub.f32 %v677, %v873
  %v962 = vsub.f32 %v678, %v873
  %v963 = vsub.f32 %v679, %v873
  %v964 = vmul.f32 %v961, %v961
  %v965 = vmul.f32 %v962, %v962
  %v966 = vmul.f32 %v963, %v963
  %v970 = vrot.slane %v964, 2
  %v971 = vrot.slane %v965, 2
  %v972 = vsel %vm782, %v970, %v971
  %v973 = vrot.slane %v966, 2
  %v974 = vsel %vm782, %v971, %v973
  %977 = vmatprep.subr.mxu0 0.0
  %978 = vmatpush1.msra.mxu0 %v695
  %979 = vmatprep.subr.mxu0 0.0
  %980 = vmatpush1.msra.mxu0 %v694
  %981 = vmatprep.subr.mxu0 0.0
  %982 = vmatpush1.msra.mxu0 %v693
  %983 = vmatprep.subr.mxu0 0.0
  %984 = vmatpush1.msra.mxu0 %v692
  %985 = vmatprep.subr.mxu0 0.0
  %986 = vmatpush1.msra.mxu0 %v691
  %987 = vmatprep.subr.mxu0 0.0
  %988 = vmatpush1.msra.mxu0 %v690
  %989 = vmatprep.subr.mxu0 0.0
  %990 = vmatpush1.msra.mxu0 %v689
  %991 = vmatprep.subr.mxu0 0.0
  %992 = vmatpush1.msra.mxu0 %v688
  %993 = vmatprep.subr.mxu0 0.0
  %994 = vmatpush1.msra.mxu0 %v687
  %995 = vmatprep.subr.mxu0 0.0
  %996 = vmatpush1.msra.mxu0 %v686
  %997 = vmatprep.subr.mxu0 0.0
  %998 = vmatpush1.msra.mxu0 %v685
  %999 = vmatprep.subr.mxu0 0.0
  %1000 = vmatpush1.msra.mxu0 %v684
  %1001 = vmatprep.subr.mxu0 0.0
  %1002 = vmatpush1.msra.mxu0 %v683
  %1003 = vmatprep.subr.mxu0 0.0
  %1004 = vmatpush1.msra.mxu0 %v682
  %1005 = vmatprep.subr.mxu0 0.0
  %1006 = vmatpush1.msra.mxu0 %v681
  %1007 = vmatprep.subr.mxu0 0.0
  %1008 = vmatpush1.msra.mxu0 %v680
  %1009 = vmatprep.subr.mxu0 0.0
  %1010 = vmatpush2.msra.mxu0 0.0
  %1011 = vmatprep.subr.mxu0 0.0
  %1012 = vmatpush2.msra.mxu0 0.0
  %1013 = vmatprep.subr.mxu0 0.0
  %1014 = vmatpush2.msra.mxu0 0.0
  %1015 = vmatprep.subr.mxu0 0.0
  %1016 = vmatpush2.msra.mxu0 0.0
  %1017 = vmatprep.subr.mxu0 0.0
  %1018 = vmatpush2.msra.mxu0 0.0
  %1019 = vmatprep.subr.mxu0 0.0
  %1020 = vmatpush2.msra.mxu0 0.0
  %1021 = vmatprep.subr.mxu0 0.0
  %1022 = vmatpush2.msra.mxu0 0.0
  %1023 = vmatprep.subr.mxu0 0.0
  %1024 = vmatpush2.msra.mxu0 0.0
  %1025 = vmatprep.subr.mxu0 0.0
  %1026 = vmatpush2.msra.mxu0 0.0
  %1027 = vmatprep.subr.mxu0 0.0
  %1028 = vmatpush2.msra.mxu0 0.0
  %1029 = vmatprep.subr.mxu0 0.0
  %1030 = vmatpush2.msra.mxu0 0.0
  %1031 = vmatprep.subr.mxu0 0.0
  %1032 = vmatpush2.msra.mxu0 0.0
  %1033 = vmatprep.subr.mxu0 0.0
  %1034 = vmatpush2.msra.mxu0 0.0
  %1035 = vmatprep.subr.mxu0 0.0
  %1036 = vmatpush2.msra.mxu0 0.0
  %1037 = vmatprep.subr.mxu0 0.0
  %1038 = vmatpush2.msra.mxu0 0.0
  %1039 = vmatprep.subr.mxu0 0.0
  %1040 = vmatpush2.msra.mxu0 0.0
  %1041 = vmatprep.mubr.f32.mxu0 0.0
  %1042 = vmatmul.mubr.f32.gmra.mxu0 %v972
  %v1043 = vpop.f32.mrf.mxu0
  %v1044 = vadd.f32 0.0, %v1043
  %v1045 = vpop.f32.mrf.mxu0
  %1046 = vmatprep.mubr.f32.mxu0 0.0
  %1047 = vmatmul.mubr.f32.gmra.mxu0 %v974
  %v1048 = vpop.f32.mrf.mxu0
  %v1049 = vadd.f32 0.0, %v1048
  %v1050 = vpop.f32.mrf.mxu0
  %1051 = vdwg.mxu0
  %v1052 = vadd.f32 %v1044, %v1049
  %v1053 = vrot.slane %v1052, 4
  %v1054 = vadd.f32 %v1052, %v1053
  %v1055 = vrot.slane %v1054, 2
  %v1056 = vadd.f32 %v1054, %v1055
  %v1057 = vrot.slane %v1056, 1
  %v1058 = vadd.f32 %v1056, %v1057
  %v1059 = vadd.f32 %v960, %v1058
  %v1060 = vmul.f32 %v1059, 0.001953125
  %v1061 = vld [vmem:[%s6] sm:$0x1]
  %v1062 = vadd.f32 %v1060, 1e-05
  %v1063 = vrsqrt.pop %v1062
  %v1064 = vmul.f32 %v1061, %v1063
  %v1065 = vld [vmem:[%s7] sm:$0x1]
  %v1066 = vmul.f32 %v873, %v1064
  %v1067 = vsub.f32 %v1065, %v1066
  %v1069 = vlaneseq
  %v1070 = vshrl.u32 %v1069, 7
  %v1071 = vsub.s32 0, %v1070
  %v1072 = vrot.slane %v1064, %v1071
  %v1074 = vmul.f32 %v675, %v1072
  %v1075 = vmul.f32 %v676, %v1072
  %v1076 = vmul.f32 %v677, %v1072
  %v1077 = vmul.f32 %v678, %v1072
  %v1078 = vmul.f32 %v679, %v1072
  %v1080 = vlaneseq
  %v1081 = vshrl.u32 %v1080, 7
  %v1082 = vsub.s32 0, %v1081
  %v1083 = vrot.slane %v1067, %v1082
  %v1085 = vadd.f32 %v1074, %v1083
  %v1086 = vadd.f32 %v1075, %v1083
  %v1087 = vadd.f32 %v1076, %v1083
  %v1088 = vadd.f32 %v1077, %v1083
  %v1089 = vadd.f32 %v1078, %v1083
  %v1090 = vmax.f32 %v1085, 0.0
  %v1091 = vmax.f32 %v1086, 0.0
  %v1092 = vmax.f32 %v1087, 0.0
  %v1093 = vmax.f32 %v1088, 0.0
  %v1094 = vmax.f32 %v1089, 0.0
  %1095 = vst [vmem:[#allocation3] sm:$0xff] 0.0
  %1096 = vst [vmem:[#allocation3 + $0x8] sm:$0xff] 0.0
  %1097 = vst [vmem:[#allocation3 + $0x10] sm:$0xff] 0.0
  %1098 = vst [vmem:[#allocation3 + $0x18] sm:$0xff] 0.0
  %1099 = vst [vmem:[#allocation3 + $0x20] sm:$0xf] 0.0
  %1100 = vst [vmem:[#allocation3 + $0x1] sm:$0xff] %v1090
  %1101 = vst [vmem:[#allocation3 + $0x9] sm:$0xff] %v1091
  %1102 = vst [vmem:[#allocation3 + $0x11] sm:$0xfc] %v1092
  %1103 = vst [vmem:[#allocation3 + $0x19] sm:$0xff] %v1093
  %1104 = vst [vmem:[#allocation3 + $0x21] sm:$0x3] %v1094
  %v1105 = vld [vmem:[#allocation3] sm:$0xff]
  %v1106 = vld [vmem:[#allocation3 + $0x8] sm:$0xff]
  %v1107 = vld [vmem:[#allocation3 + $0x10] sm:$0xff]
  %v1108 = vld [vmem:[#allocation3 + $0x18] sm:$0xff]
  %v1109 = vld [vmem:[#allocation3 + $0x20] sm:$0x3]
  %v1110 = vld [vmem:[%s3] sm:$0xff]
  %v1111 = vld [vmem:[%s3 + $0x8] sm:$0xff]
  %v1112 = vld [vmem:[%s3 + $0x10] sm:$0xff]
  %v1113 = vld [vmem:[%s3 + $0x18] sm:$0xff]
  %v1114 = vld [vmem:[%s3 + $0x20] sm:$0xff]
  %v1115 = vld [vmem:[%s3 + $0x28] sm:$0xff]
  %v1116 = vld [vmem:[%s3 + $0x30] sm:$0xff]
  %v1117 = vld [vmem:[%s3 + $0x38] sm:$0xff]
  %v1118 = vld [vmem:[%s3 + $0x40] sm:$0xff]
  %v1119 = vld [vmem:[%s3 + $0x48] sm:$0xff]
  %v1120 = vld [vmem:[%s3 + $0x50] sm:$0xff]
  %v1121 = vld [vmem:[%s3 + $0x58] sm:$0xff]
  %v1122 = vld [vmem:[%s3 + $0x60] sm:$0xff]
  %v1123 = vld [vmem:[%s3 + $0x68] sm:$0xff]
  %v1124 = vld [vmem:[%s3 + $0x70] sm:$0xff]
  %v1125 = vld [vmem:[%s3 + $0x78] sm:$0xff]
  %v1126 = vld [vmem:[#allocation3 + $0x1] sm:$0xff]
  %v1127 = vld [vmem:[#allocation3 + $0x9] sm:$0xff]
  %v1128 = vld [vmem:[#allocation3 + $0x11] sm:$0xff]
  %v1129 = vld [vmem:[#allocation3 + $0x19] sm:$0xff]
  %v1130 = vld [vmem:[#allocation3 + $0x21] sm:$0x3]
  %s1131 = scalar_lea.vmem %s3, 128
  %v1132 = vld [vmem:[%s1131] sm:$0xff]
  %v1133 = vld [vmem:[%s1131 + $0x8] sm:$0xff]
  %v1134 = vld [vmem:[%s1131 + $0x10] sm:$0xff]
  %v1135 = vld [vmem:[%s1131 + $0x18] sm:$0xff]
  %v1136 = vld [vmem:[%s1131 + $0x20] sm:$0xff]
  %v1137 = vld [vmem:[%s1131 + $0x28] sm:$0xff]
  %v1138 = vld [vmem:[%s1131 + $0x30] sm:$0xff]
  %v1139 = vld [vmem:[%s1131 + $0x38] sm:$0xff]
  %v1140 = vld [vmem:[%s1131 + $0x40] sm:$0xff]
  %v1141 = vld [vmem:[%s1131 + $0x48] sm:$0xff]
  %v1142 = vld [vmem:[%s1131 + $0x50] sm:$0xff]
  %v1143 = vld [vmem:[%s1131 + $0x58] sm:$0xff]
  %v1144 = vld [vmem:[%s1131 + $0x60] sm:$0xff]
  %v1145 = vld [vmem:[%s1131 + $0x68] sm:$0xff]
  %v1146 = vld [vmem:[%s1131 + $0x70] sm:$0xff]
  %v1147 = vld [vmem:[%s1131 + $0x78] sm:$0xff]
  %1148 = vmatprep.subr.mxu0 0.0
  %1149 = vmatpush1.msra.mxu0 %v1147
  %1150 = vmatprep.subr.mxu0 0.0
  %1151 = vmatpush1.msra.mxu0 %v1146
  %1152 = vmatprep.subr.mxu0 0.0
  %1153 = vmatpush1.msra.mxu0 %v1145
  %1154 = vmatprep.subr.mxu0 0.0
  %1155 = vmatpush1.msra.mxu0 %v1144
  %1156 = vmatprep.subr.mxu0 0.0
  %1157 = vmatpush1.msra.mxu0 %v1143
  %1158 = vmatprep.subr.mxu0 0.0
  %1159 = vmatpush1.msra.mxu0 %v1142
  %1160 = vmatprep.subr.mxu0 0.0
  %1161 = vmatpush1.msra.mxu0 %v1141
  %1162 = vmatprep.subr.mxu0 0.0
  %1163 = vmatpush1.msra.mxu0 %v1140
  %1164 = vmatprep.subr.mxu0 0.0
  %1165 = vmatpush1.msra.mxu0 %v1139
  %1166 = vmatprep.subr.mxu0 0.0
  %1167 = vmatpush1.msra.mxu0 %v1138
  %1168 = vmatprep.subr.mxu0 0.0
  %1169 = vmatpush1.msra.mxu0 %v1137
  %1170 = vmatprep.subr.mxu0 0.0
  %1171 = vmatpush1.msra.mxu0 %v1136
  %1172 = vmatprep.subr.mxu0 0.0
  %1173 = vmatpush1.msra.mxu0 %v1135
  %1174 = vmatprep.subr.mxu0 0.0
  %1175 = vmatpush1.msra.mxu0 %v1134
  %1176 = vmatprep.subr.mxu0 0.0
  %1177 = vmatpush1.msra.mxu0 %v1133
  %1178 = vmatprep.subr.mxu0 0.0
  %1179 = vmatpush1.msra.mxu0 %v1132
  %1180 = vmatprep.subr.mxu0 0.0
  %1181 = vmatpush2.msra.mxu0 0.0
  %1182 = vmatprep.subr.mxu0 0.0
  %1183 = vmatpush2.msra.mxu0 0.0
  %1184 = vmatprep.subr.mxu0 0.0
  %1185 = vmatpush2.msra.mxu0 0.0
  %1186 = vmatprep.subr.mxu0 0.0
  %1187 = vmatpush2.msra.mxu0 0.0
  %1188 = vmatprep.subr.mxu0 0.0
  %1189 = vmatpush2.msra.mxu0 0.0
  %1190 = vmatprep.subr.mxu0 0.0
  %1191 = vmatpush2.msra.mxu0 0.0
  %1192 = vmatprep.subr.mxu0 0.0
  %1193 = vmatpush2.msra.mxu0 0.0
  %1194 = vmatprep.subr.mxu0 0.0
  %1195 = vmatpush2.msra.mxu0 0.0
  %1196 = vmatprep.subr.mxu0 0.0
  %1197 = vmatpush2.msra.mxu0 0.0
  %1198 = vmatprep.subr.mxu0 0.0
  %1199 = vmatpush2.msra.mxu0 0.0
  %1200 = vmatprep.subr.mxu0 0.0
  %1201 = vmatpush2.msra.mxu0 0.0
  %1202 = vmatprep.subr.mxu0 0.0
  %1203 = vmatpush2.msra.mxu0 0.0
  %1204 = vmatprep.subr.mxu0 0.0
  %1205 = vmatpush2.msra.mxu0 0.0
  %1206 = vmatprep.subr.mxu0 0.0
  %1207 = vmatpush2.msra.mxu0 0.0
  %1208 = vmatprep.subr.mxu0 0.0
  %1209 = vmatpush2.msra.mxu0 0.0
  %1210 = vmatprep.subr.mxu0 0.0
  %1211 = vmatpush2.msra.mxu0 0.0
  %1212 = vmatprep.mubr.f32.mxu0 0.0
  %1213 = vmatmul.mubr.f32.gmra.mxu0 %v1126
  %v1214 = vpop.f32.mrf.mxu0
  %v1215 = vadd.f32 0.0, %v1214
  %v1216 = vpop.f32.mrf.mxu0
  %1217 = vmatprep.mubr.f32.mxu0 0.0
  %1218 = vmatmul.mubr.f32.gmra.mxu0 %v1127
  %v1219 = vpop.f32.mrf.mxu0
  %v1220 = vadd.f32 0.0, %v1219
  %v1221 = vpop.f32.mrf.mxu0
  %1222 = vmatprep.mubr.f32.mxu0 0.0
  %1223 = vmatmul.mubr.f32.gmra.mxu0 %v1128
  %v1224 = vpop.f32.mrf.mxu0
  %v1225 = vadd.f32 0.0, %v1224
  %v1226 = vpop.f32.mrf.mxu0
  %1227 = vmatprep.mubr.f32.mxu0 0.0
  %1228 = vmatmul.mubr.f32.gmra.mxu0 %v1129
  %v1229 = vpop.f32.mrf.mxu0
  %v1230 = vadd.f32 0.0, %v1229
  %v1231 = vpop.f32.mrf.mxu0
  %1232 = vmatprep.mubr.f32.mxu0 0.0
  %1233 = vmatmul.mubr.f32.gmra.mxu0 %v1130
  %v1234 = vpop.f32.mrf.mxu0
  %v1235 = vadd.f32 0.0, %v1234
  %v1236 = vpop.f32.mrf.mxu0
  %1237 = vdwg.mxu0
  %1238 = vmatprep.subr.mxu0 0.0
  %1239 = vmatpush1.msra.mxu0 %v1125
  %1240 = vmatprep.subr.mxu0 0.0
  %1241 = vmatpush1.msra.mxu0 %v1124
  %1242 = vmatprep.subr.mxu0 0.0
  %1243 = vmatpush1.msra.mxu0 %v1123
  %1244 = vmatprep.subr.mxu0 0.0
  %1245 = vmatpush1.msra.mxu0 %v1122
  %1246 = vmatprep.subr.mxu0 0.0
  %1247 = vmatpush1.msra.mxu0 %v1121
  %1248 = vmatprep.subr.mxu0 0.0
  %1249 = vmatpush1.msra.mxu0 %v1120
  %1250 = vmatprep.subr.mxu0 0.0
  %1251 = vmatpush1.msra.mxu0 %v1119
  %1252 = vmatprep.subr.mxu0 0.0
  %1253 = vmatpush1.msra.mxu0 %v1118
  %1254 = vmatprep.subr.mxu0 0.0
  %1255 = vmatpush1.msra.mxu0 %v1117
  %1256 = vmatprep.subr.mxu0 0.0
  %1257 = vmatpush1.msra.mxu0 %v1116
  %1258 = vmatprep.subr.mxu0 0.0
  %1259 = vmatpush1.msra.mxu0 %v1115
  %1260 = vmatprep.subr.mxu0 0.0
  %1261 = vmatpush1.msra.mxu0 %v1114
  %1262 = vmatprep.subr.mxu0 0.0
  %1263 = vmatpush1.msra.mxu0 %v1113
  %1264 = vmatprep.subr.mxu0 0.0
  %1265 = vmatpush1.msra.mxu0 %v1112
  %1266 = vmatprep.subr.mxu0 0.0
  %1267 = vmatpush1.msra.mxu0 %v1111
  %1268 = vmatprep.subr.mxu0 0.0
  %1269 = vmatpush1.msra.mxu0 %v1110
  %1270 = vmatprep.subr.mxu0 0.0
  %1271 = vmatpush2.msra.mxu0 0.0
  %1272 = vmatprep.subr.mxu0 0.0
  %1273 = vmatpush2.msra.mxu0 0.0
  %1274 = vmatprep.subr.mxu0 0.0
  %1275 = vmatpush2.msra.mxu0 0.0
  %1276 = vmatprep.subr.mxu0 0.0
  %1277 = vmatpush2.msra.mxu0 0.0
  %1278 = vmatprep.subr.mxu0 0.0
  %1279 = vmatpush2.msra.mxu0 0.0
  %1280 = vmatprep.subr.mxu0 0.0
  %1281 = vmatpush2.msra.mxu0 0.0
  %1282 = vmatprep.subr.mxu0 0.0
  %1283 = vmatpush2.msra.mxu0 0.0
  %1284 = vmatprep.subr.mxu0 0.0
  %1285 = vmatpush2.msra.mxu0 0.0
  %1286 = vmatprep.subr.mxu0 0.0
  %1287 = vmatpush2.msra.mxu0 0.0
  %1288 = vmatprep.subr.mxu0 0.0
  %1289 = vmatpush2.msra.mxu0 0.0
  %1290 = vmatprep.subr.mxu0 0.0
  %1291 = vmatpush2.msra.mxu0 0.0
  %1292 = vmatprep.subr.mxu0 0.0
  %1293 = vmatpush2.msra.mxu0 0.0
  %1294 = vmatprep.subr.mxu0 0.0
  %1295 = vmatpush2.msra.mxu0 0.0
  %1296 = vmatprep.subr.mxu0 0.0
  %1297 = vmatpush2.msra.mxu0 0.0
  %1298 = vmatprep.subr.mxu0 0.0
  %1299 = vmatpush2.msra.mxu0 0.0
  %1300 = vmatprep.subr.mxu0 0.0
  %1301 = vmatpush2.msra.mxu0 0.0
  %1302 = vmatprep.mubr.f32.mxu0 0.0
  %1303 = vmatmul.mubr.f32.gmra.mxu0 %v1105
  %v1304 = vpop.f32.mrf.mxu0
  %v1305 = vadd.f32 %v1215, %v1304
  %v1306 = vpop.f32.mrf.mxu0
  %1307 = vmatprep.mubr.f32.mxu0 0.0
  %1308 = vmatmul.mubr.f32.gmra.mxu0 %v1106
  %v1309 = vpop.f32.mrf.mxu0
  %v1310 = vadd.f32 %v1220, %v1309
  %v1311 = vpop.f32.mrf.mxu0
  %1312 = vmatprep.mubr.f32.mxu0 0.0
  %1313 = vmatmul.mubr.f32.gmra.mxu0 %v1107
  %v1314 = vpop.f32.mrf.mxu0
  %v1315 = vadd.f32 %v1225, %v1314
  %v1316 = vpop.f32.mrf.mxu0
  %1317 = vmatprep.mubr.f32.mxu0 0.0
  %1318 = vmatmul.mubr.f32.gmra.mxu0 %v1108
  %v1319 = vpop.f32.mrf.mxu0
  %v1320 = vadd.f32 %v1230, %v1319
  %v1321 = vpop.f32.mrf.mxu0
  %1322 = vmatprep.mubr.f32.mxu0 0.0
  %1323 = vmatmul.mubr.f32.gmra.mxu0 %v1109
  %v1324 = vpop.f32.mrf.mxu0
  %v1325 = vadd.f32 %v1235, %v1324
  %v1326 = vpop.f32.mrf.mxu0
  %1327 = vdwg.mxu0
  %v1328 = vld [vmem:[#allocation3 + $0x2] sm:$0xff]
  %v1329 = vld [vmem:[#allocation3 + $0xa] sm:$0xff]
  %v1330 = vld [vmem:[#allocation3 + $0x12] sm:$0xff]
  %v1331 = vld [vmem:[#allocation3 + $0x1a] sm:$0xff]
  %v1332 = vld [vmem:[#allocation3 + $0x22] sm:$0x3]
  %s1333 = scalar_lea.vmem %s3, 256
  %v1334 = vld [vmem:[%s1333] sm:$0xff]
  %v1335 = vld [vmem:[%s1333 + $0x8] sm:$0xff]
  %v1336 = vld [vmem:[%s1333 + $0x10] sm:$0xff]
  %v1337 = vld [vmem:[%s1333 + $0x18] sm:$0xff]
  %v1338 = vld [vmem:[%s1333 + $0x20] sm:$0xff]
  %v1339 = vld [vmem:[%s1333 + $0x28] sm:$0xff]
  %v1340 = vld [vmem:[%s1333 + $0x30] sm:$0xff]
  %v1341 = vld [vmem:[%s1333 + $0x38] sm:$0xff]
  %v1342 = vld [vmem:[%s1333 + $0x40] sm:$0xff]
  %v1343 = vld [vmem:[%s1333 + $0x48] sm:$0xff]
  %v1344 = vld [vmem:[%s1333 + $0x50] sm:$0xff]
  %v1345 = vld [vmem:[%s1333 + $0x58] sm:$0xff]
  %v1346 = vld [vmem:[%s1333 + $0x60] sm:$0xff]
  %v1347 = vld [vmem:[%s1333 + $0x68] sm:$0xff]
  %v1348 = vld [vmem:[%s1333 + $0x70] sm:$0xff]
  %v1349 = vld [vmem:[%s1333 + $0x78] sm:$0xff]
  %1350 = vmatprep.subr.mxu0 0.0
  %1351 = vmatpush1.msra.mxu0 %v1349
  %1352 = vmatprep.subr.mxu0 0.0
  %1353 = vmatpush1.msra.mxu0 %v1348
  %1354 = vmatprep.subr.mxu0 0.0
  %1355 = vmatpush1.msra.mxu0 %v1347
  %1356 = vmatprep.subr.mxu0 0.0
  %1357 = vmatpush1.msra.mxu0 %v1346
  %1358 = vmatprep.subr.mxu0 0.0
  %1359 = vmatpush1.msra.mxu0 %v1345
  %1360 = vmatprep.subr.mxu0 0.0
  %1361 = vmatpush1.msra.mxu0 %v1344
  %1362 = vmatprep.subr.mxu0 0.0
  %1363 = vmatpush1.msra.mxu0 %v1343
  %1364 = vmatprep.subr.mxu0 0.0
  %1365 = vmatpush1.msra.mxu0 %v1342
  %1366 = vmatprep.subr.mxu0 0.0
  %1367 = vmatpush1.msra.mxu0 %v1341
  %1368 = vmatprep.subr.mxu0 0.0
  %1369 = vmatpush1.msra.mxu0 %v1340
  %1370 = vmatprep.subr.mxu0 0.0
  %1371 = vmatpush1.msra.mxu0 %v1339
  %1372 = vmatprep.subr.mxu0 0.0
  %1373 = vmatpush1.msra.mxu0 %v1338
  %1374 = vmatprep.subr.mxu0 0.0
  %1375 = vmatpush1.msra.mxu0 %v1337
  %1376 = vmatprep.subr.mxu0 0.0
  %1377 = vmatpush1.msra.mxu0 %v1336
  %1378 = vmatprep.subr.mxu0 0.0
  %1379 = vmatpush1.msra.mxu0 %v1335
  %1380 = vmatprep.subr.mxu0 0.0
  %1381 = vmatpush1.msra.mxu0 %v1334
  %1382 = vmatprep.subr.mxu0 0.0
  %1383 = vmatpush2.msra.mxu0 0.0
  %1384 = vmatprep.subr.mxu0 0.0
  %1385 = vmatpush2.msra.mxu0 0.0
  %1386 = vmatprep.subr.mxu0 0.0
  %1387 = vmatpush2.msra.mxu0 0.0
  %1388 = vmatprep.subr.mxu0 0.0
  %1389 = vmatpush2.msra.mxu0 0.0
  %1390 = vmatprep.subr.mxu0 0.0
  %1391 = vmatpush2.msra.mxu0 0.0
  %1392 = vmatprep.subr.mxu0 0.0
  %1393 = vmatpush2.msra.mxu0 0.0
  %1394 = vmatprep.subr.mxu0 0.0
  %1395 = vmatpush2.msra.mxu0 0.0
  %1396 = vmatprep.subr.mxu0 0.0
  %1397 = vmatpush2.msra.mxu0 0.0
  %1398 = vmatprep.subr.mxu0 0.0
  %1399 = vmatpush2.msra.mxu0 0.0
  %1400 = vmatprep.subr.mxu0 0.0
  %1401 = vmatpush2.msra.mxu0 0.0
  %1402 = vmatprep.subr.mxu0 0.0
  %1403 = vmatpush2.msra.mxu0 0.0
  %1404 = vmatprep.subr.mxu0 0.0
  %1405 = vmatpush2.msra.mxu0 0.0
  %1406 = vmatprep.subr.mxu0 0.0
  %1407 = vmatpush2.msra.mxu0 0.0
  %1408 = vmatprep.subr.mxu0 0.0
  %1409 = vmatpush2.msra.mxu0 0.0
  %1410 = vmatprep.subr.mxu0 0.0
  %1411 = vmatpush2.msra.mxu0 0.0
  %1412 = vmatprep.subr.mxu0 0.0
  %1413 = vmatpush2.msra.mxu0 0.0
  %1414 = vmatprep.mubr.f32.mxu0 0.0
  %1415 = vmatmul.mubr.f32.gmra.mxu0 %v1328
  %v1416 = vpop.f32.mrf.mxu0
  %v1417 = vadd.f32 0.0, %v1416
  %v1418 = vpop.f32.mrf.mxu0
  %1419 = vmatprep.mubr.f32.mxu0 0.0
  %1420 = vmatmul.mubr.f32.gmra.mxu0 %v1329
  %v1421 = vpop.f32.mrf.mxu0
  %v1422 = vadd.f32 0.0, %v1421
  %v1423 = vpop.f32.mrf.mxu0
  %1424 = vmatprep.mubr.f32.mxu0 0.0
  %1425 = vmatmul.mubr.f32.gmra.mxu0 %v1330
  %v1426 = vpop.f32.mrf.mxu0
  %v1427 = vadd.f32 0.0, %v1426
  %v1428 = vpop.f32.mrf.mxu0
  %1429 = vmatprep.mubr.f32.mxu0 0.0
  %1430 = vmatmul.mubr.f32.gmra.mxu0 %v1331
  %v1431 = vpop.f32.mrf.mxu0
  %v1432 = vadd.f32 0.0, %v1431
  %v1433 = vpop.f32.mrf.mxu0
  %1434 = vmatprep.mubr.f32.mxu0 0.0
  %1435 = vmatmul.mubr.f32.gmra.mxu0 %v1332
  %v1436 = vpop.f32.mrf.mxu0
  %v1437 = vadd.f32 0.0, %v1436
  %v1438 = vpop.f32.mrf.mxu0
  %1439 = vdwg.mxu0
  %v1440 = vadd.f32 %v1305, %v1417
  %v1441 = vadd.f32 %v1310, %v1422
  %v1442 = vadd.f32 %v1315, %v1427
  %v1443 = vadd.f32 %v1320, %v1432
  %v1444 = vadd.f32 %v1325, %v1437
  %v1445 = vld [vmem:[%s1] sm:$0xff]
  %v1446 = vld [vmem:[%s1 + $0x8] sm:$0xff]
  %v1447 = vadd.f32 %v1440, %v1445
  %v1448 = vadd.f32 %v1441, %v1446
  %1449 = vst [vmem:[%s10] sm:$0xff] %v1447
  %1450 = vst [vmem:[%s10 + $0x8] sm:$0xff] %v1448
  %v1451 = vld [vmem:[%s1 + $0x10] sm:$0xff]
  %v1452 = vld [vmem:[%s1 + $0x18] sm:$0xff]
  %vm1455 = vcmask 1041408
  %v1456 = vrot.slane %v1451, 6
  %v1457 = vrot.slane %v1452, 6
  %v1458 = vsel %vm1455, %v1456, %v1457
  %v1462 = vadd.f32 %v1442, %v1456
  %v1463 = vadd.f32 %v1443, %v1458
  %v1464 = vadd.f32 %v1444, %v1457
  %1465 = vst [vmem:[%s10 + $0xe] sm:$0xfc] %v1462
  %1466 = vst [vmem:[%s10 + $0x16] sm:$0xff] %v1463
  %1467 = vst [vmem:[%s10 + $0x1e] sm:$0x3] %v1464
  // Predicated region
  $region42: #{_lambda_.1} parent=0 // pred_check
    _
  $region43: #{_lambda_.1} parent=0 // pred_check_branch
    %1469 = sbr.rel (0) target = $region45
  $region44: #{_lambda_.1} parent=0 // pred_region
    _
  $region45: #{_lambda_.1} parent=0 // pred_fallthru
    _
  // Predicated region
  $region46: #{_lambda_.1} parent=0 // pred_check
    _
  $region47: #{_lambda_.1} parent=0 // pred_check_branch
    %1471 = sbr.rel (0) target = $region49
  $region48: #{_lambda_.1} parent=0 // pred_region
    _
  $region49: #{_lambda_.1} parent=0 // pred_fallthru
    _

</llo_original>
